<compile_context>
chip_gen: v6e
topology: v6e:2x2x1
jax: 0.10.0
libtpu: 0.0.40
codegen_flags: <defaults>
</compile_context>

<pallas_src>
import functools

import jax
import jax.numpy as jnp
from jax.experimental import pallas as pl
from jax.experimental.pallas import tpu as pltpu

EPS = 1e-5

# Matmul operand dtype.  f32 preserves PyTorch numerics exactly (and v5e has no
# bf16 VPU); on v6e/v7x set to jnp.bfloat16 for ~2-3x MXU throughput and half
# the weight VMEM/DMA bytes (accumulation stays f32 via preferred_element_type).
MXU_DTYPE = jnp.float32


# ---------------------------------------------------------------------------
# In-kernel helpers
# ---------------------------------------------------------------------------
def _bn_act(x2, n_rows, gamma_ref, beta_ref, relu):
    """Training-mode BatchNorm2d (+ optional ReLU) on a [N, C] slab.

    One pass: sum and sum-of-squares -> biased var -> folded scale/shift
    (2 sublane reductions and 2 VPU ops/element instead of 4).
    gamma_ref / beta_ref: [1, C] VMEM refs.
    """
    inv_n = 1.0 / float(n_rows)
    s = jnp.sum(x2, axis=0, keepdims=True)            # [1, C]
    ss = jnp.sum(x2 * x2, axis=0, keepdims=True)      # [1, C]
    mean = s * inv_n
    var = jnp.maximum(ss * inv_n - mean * mean, 0.0)  # biased variance
    scale = gamma_ref[...] * jax.lax.rsqrt(var + EPS)
    shift = beta_ref[...] - mean * scale
    y = x2 * scale + shift
    return jnp.maximum(y, 0.0) if relu else y


def _write_padded(pad_ref, y4, B, H, W, C):
    """Write y4 [B,H,W,C] into pad_ref [B,H+2,W+2,C] with a zero halo.

    Halo-only zeroing: two border rows + two border columns instead of zeroing
    the full buffer and immediately overwriting the interior (~2x fewer scratch
    stores; matters most on v5e's single vst slot)."""
    pad_ref[:, 0:1, :, :] = jnp.zeros((B, 1, W + 2, C), jnp.float32)
    pad_ref[:, H + 1:H + 2, :, :] = jnp.zeros((B, 1, W + 2, C), jnp.float32)
    pad_ref[:, 1:H + 1, 0:1, :] = jnp.zeros((B, H, 1, C), jnp.float32)
    pad_ref[:, 1:H + 1, W + 1:W + 2, :] = jnp.zeros((B, H, 1, C), jnp.float32)
    pad_ref[:, 1:H + 1, 1:W + 1, :] = y4


def _conv3x3_im2col(pad_ref, col_ref, w_ref, B, Ho, Wo, Cin, Cout, stride):
    """3x3 conv (pad=1) as in-kernel im2col + ONE big-K matmul.

    pad_ref: zero-padded activations [B, Hi+2, Wi+2, Cin] (VMEM scratch).
    col_ref: im2col slab scratch [B*Ho*Wo, 9*Cin].
    w_ref:   [9*Cin, Cout] (rows ordered kh, kw, cin).
    Returns  [B*Ho*Wo, Cout] float32.
    """
    for kh in range(3):
        for kw in range(3):
            if stride == 1:
                win = pad_ref[:, pl.ds(kh, Ho), pl.ds(kw, Wo), :]
            else:
                win = pad_ref[:, pl.ds(kh, Ho, stride=stride),
                              pl.ds(kw, Wo, stride=stride), :]
            t = kh * 3 + kw
            col_ref[:, t * Cin:(t + 1) * Cin] = win.reshape(B * Ho * Wo, Cin)
    # One matmul with K = 9*Cin instead of 9 tiny-K dots + 8 accumulation adds.
    return jnp.dot(col_ref[...].astype(MXU_DTYPE), w_ref[...],
                   preferred_element_type=jnp.float32)


# ---------------------------------------------------------------------------
# The fused kernel
# ---------------------------------------------------------------------------
def _se_preact_kernel(*refs, dims, stride, has_shortcut):
    B, H, W, Cin, Cout, Ho, Wo = dims
    if has_shortcut:
        (x_ref, bn1_g, bn1_b, w1_ref, bn2_g, bn2_b, w2_ref,
         fc1_w, fc1_b, fc2_w, fc2_b, sc_w, sc_g, sc_b,
         o_ref, pad1, pad2, col1, col2) = refs
    else:
        (x_ref, bn1_g, bn1_b, w1_ref, bn2_g, bn2_b, w2_ref,
         fc1_w, fc1_b, fc2_w, fc2_b,
         o_ref, pad1, pad2, col1, col2) = refs
        sc_w = sc_g = sc_b = None

    x4 = x_ref[...]                                    # [B, H, W, Cin]
    x2 = x4.reshape(B * H * W, Cin)

    # ---- out = relu(bn1(x)) -------------------------------------------------
    y1 = _bn_act(x2, B * H * W, bn1_g, bn1_b, relu=True)

    # ---- out = conv1(out)   (3x3, stride, pad=1, no bias) -------------------
    _write_padded(pad1, y1.reshape(B, H, W, Cin), B, H, W, Cin)
    c1 = _conv3x3_im2col(pad1, col1, w1_ref, B, Ho, Wo, Cin, Cout, stride)

    # ---- out = relu(bn2(out)); dropout(p=0.0) == identity -------------------
    # TODO(synk): stochastic dropout (p > 0) would need pltpu.prng_seed/_random_bits.
    y2 = _bn_act(c1, B * Ho * Wo, bn2_g, bn2_b, relu=True)

    # ---- out = conv2(out)   (3x3, stride=1, pad=1, no bias) -----------------
    _write_padded(pad2, y2.reshape(B, Ho, Wo, Cout), B, Ho, Wo, Cout)
    c2 = _conv3x3_im2col(pad2, col2, w2_ref, B, Ho, Wo, Cout, Cout, 1)

    # ---- shortcut(x): 1x1 strided conv + BN (applied to raw x), or identity --
    if has_shortcut:
        if stride == 1:
            xs4 = x4
        else:
            xs4 = x_ref[:, pl.ds(0, Ho, stride=stride),
                        pl.ds(0, Wo, stride=stride), :]          # strided read
        sc_lin = jnp.dot(xs4.reshape(B * Ho * Wo, Cin).astype(MXU_DTYPE),
                         sc_w[...],
                         preferred_element_type=jnp.float32)     # [B*Ho*Wo, Cout]
        sc2 = _bn_act(sc_lin, B * Ho * Wo, sc_g, sc_b, relu=False)
    else:
        sc2 = x2                                       # identity shortcut

    # ---- SE: global avg-pool -> fc1+relu -> fc2+sigmoid -> channel scale ----
    pooled = jnp.mean(c2.reshape(B, Ho * Wo, Cout), axis=1)      # [B, Cout]
    h = jnp.dot(pooled, fc1_w[...], preferred_element_type=jnp.float32) + fc1_b[...]
    h = jnp.maximum(h, 0.0)
    z = jnp.dot(h, fc2_w[...], preferred_element_type=jnp.float32) + fc2_b[...]
    # sigmoid: exp and approx reciprocal both ride the EUP slot (free filler).
    gate = pl.reciprocal(1.0 + jnp.exp(-z), approx=True)         # [B, Cout]

    # ---- out = se(out) + shortcut(x) -----------------------------------------
    res4 = (c2.reshape(B, Ho, Wo, Cout) * gate[:, None, None, :]
            + sc2.reshape(B, Ho, Wo, Cout))                      # [B, Ho, Wo, Cout]
    # Single lane-dense store: [B*Ho, Wo*Cout] with last dim a multiple of 128
    # => one unmasked full-width writeback instead of Wo masked 32-lane stores.
    o_ref[...] = res4.reshape(B * Ho, Wo * Cout)


# ---------------------------------------------------------------------------
# Wrapper
# ---------------------------------------------------------------------------
def se_preact_block(x_nhwc, params, stride):
    """Fused SEPreActBlock forward.  x_nhwc: [B, H, W, Cin] f32 -> [B, Ho, Wo, Cout]."""
    B, H, W, Cin = x_nhwc.shape
    Cout = params["conv1_w"].shape[-1]
    Cr = params["fc1_w"].shape[-1]
    Ho = (H + 2 - 3) // stride + 1
    Wo = (W + 2 - 3) // stride + 1
    has_shortcut = (stride != 1) or (Cin != Cout)

    # Conv weights are pre-reshaped to [9*Cin, Cout] (rows ordered kh, kw, cin)
    # so each conv is a single big-K matmul; cast once here if MXU_DTYPE != f32.
    inputs = [
        x_nhwc,
        params["bn1_gamma"], params["bn1_beta"],
        params["conv1_w"].reshape(9 * Cin, Cout).astype(MXU_DTYPE),
        params["bn2_gamma"], params["bn2_beta"],
        params["conv2_w"].reshape(9 * Cout, Cout).astype(MXU_DTYPE),
        params["fc1_w"], params["fc1_b"],
        params["fc2_w"], params["fc2_b"],
    ]
    if has_shortcut:
        inputs += [params["sc_conv_w"].reshape(Cin, Cout).astype(MXU_DTYPE),
                   params["sc_bn_gamma"], params["sc_bn_beta"]]

    kernel = functools.partial(
        _se_preact_kernel,
        dims=(B, H, W, Cin, Cout, Ho, Wo),
        stride=stride, has_shortcut=has_shortcut)

    # Advisory cost so XLA overlaps the NCHW<->NHWC transposes with the call.
    conv_flops = 2 * B * Ho * Wo * (9 * Cin * Cout + 9 * Cout * Cout)
    sc_flops = 2 * B * Ho * Wo * Cin * Cout if has_shortcut else 0
    se_flops = 4 * B * Cout * Cr
    ew_flops = 12 * (B * H * W * Cin + 2 * B * Ho * Wo * Cout)
    bytes_accessed = 4 * (sum(int(a.size) for a in inputs) + B * Ho * Wo * Cout)
    cost = pl.CostEstimate(flops=int(conv_flops + sc_flops + se_flops + ew_flops),
                           transcendentals=int(2 * B * Cout),
                           bytes_accessed=int(bytes_accessed))

    out2d = pl.pallas_call(
        kernel,
        out_shape=jax.ShapeDtypeStruct((B * Ho, Wo * Cout), jnp.float32),
        in_specs=[pl.BlockSpec(memory_space=pltpu.MemorySpace.VMEM)] * len(inputs),
        out_specs=pl.BlockSpec(memory_space=pltpu.MemorySpace.VMEM),
        scratch_shapes=[
            pltpu.VMEM((B, H + 2, W + 2, Cin), jnp.float32),      # padded bn1 output
            pltpu.VMEM((B, Ho + 2, Wo + 2, Cout), jnp.float32),   # padded bn2 output
            pltpu.VMEM((B * Ho * Wo, 9 * Cin), jnp.float32),      # im2col slab conv1
            pltpu.VMEM((B * Ho * Wo, 9 * Cout), jnp.float32),     # im2col slab conv2
        ],
        cost_estimate=cost,
    )(*inputs)

    return out2d.reshape(B, Ho, Wo, Cout)


# ---------------------------------------------------------------------------
# Driver
# ---------------------------------------------------------------------------
if __name__ == "__main__":
    B, Cin, Cout, H, W = 2, 16, 32, 8, 8
    stride = 2
    reduction = 16
    Cr = Cout // reduction                                 # = 2

    key = jax.random.PRNGKey(0)
    ks = jax.random.split(key, 6)

    # PyTorch-style NCHW input -> NHWC for the kernel
    x_nchw = jax.random.normal(ks[0], (B, Cin, H, W), jnp.float32)
    x_nhwc = jnp.transpose(x_nchw, (0, 2, 3, 1))

    params = dict(
        # BatchNorm2d defaults: weight=1, bias=0 (stored as [1, C])
        bn1_gamma=jnp.ones((1, Cin), jnp.float32),
        bn1_beta=jnp.zeros((1, Cin), jnp.float32),
        conv1_w=0.1 * jax.random.normal(ks[1], (3, 3, Cin, Cout), jnp.float32),
        bn2_gamma=jnp.ones((1, Cout), jnp.float32),
        bn2_beta=jnp.zeros((1, Cout), jnp.float32),
        conv2_w=0.1 * jax.random.normal(ks[2], (3, 3, Cout, Cout), jnp.float32),
        # SE block linears (stored [in, out]); biases zero for determinism
        fc1_w=0.1 * jax.random.normal(ks[3], (Cout, Cr), jnp.float32),
        fc1_b=jnp.zeros((1, Cr), jnp.float32),
        fc2_w=0.1 * jax.random.normal(ks[4], (Cr, Cout), jnp.float32),
        fc2_b=jnp.zeros((1, Cout), jnp.float32),
        # shortcut: 1x1 strided conv + BN (applied to the raw input x)
        sc_conv_w=0.1 * jax.random.normal(ks[5], (1, 1, Cin, Cout), jnp.float32),
        sc_bn_gamma=jnp.ones((1, Cout), jnp.float32),
        sc_bn_beta=jnp.zeros((1, Cout), jnp.float32),
    )

    out_nhwc = se_preact_block(x_nhwc, params, stride=stride)
    out_nchw = jnp.transpose(out_nhwc, (0, 3, 1, 2))       # back to PyTorch NCHW
    jax.block_until_ready(out_nchw)
    assert out_nchw.shape == (B, Cout, H // stride, W // stride)
    assert bool(jnp.all(jnp.isfinite(out_nchw)))
    print("KERNEL_OK")
</pallas_src>

<mosaic_0001>
module attributes {stable_mosaic.version = 11 : i64} {
  func.func @_se_preact_kernel(%arg0: memref<2x8x8x16xf32, #tpu.memory_space<vmem>>, %arg1: memref<1x16xf32, #tpu.memory_space<vmem>>, %arg2: memref<1x16xf32, #tpu.memory_space<vmem>>, %arg3: memref<144x32xf32, #tpu.memory_space<vmem>>, %arg4: memref<1x32xf32, #tpu.memory_space<vmem>>, %arg5: memref<1x32xf32, #tpu.memory_space<vmem>>, %arg6: memref<288x32xf32, #tpu.memory_space<vmem>>, %arg7: memref<32x2xf32, #tpu.memory_space<vmem>>, %arg8: memref<1x2xf32, #tpu.memory_space<vmem>>, %arg9: memref<2x32xf32, #tpu.memory_space<vmem>>, %arg10: memref<1x32xf32, #tpu.memory_space<vmem>>, %arg11: memref<16x32xf32, #tpu.memory_space<vmem>>, %arg12: memref<1x32xf32, #tpu.memory_space<vmem>>, %arg13: memref<1x32xf32, #tpu.memory_space<vmem>>, %arg14: memref<8x128xf32, #tpu.memory_space<vmem>>, %arg15: memref<2x10x10x16xf32, #tpu.memory_space<vmem>>, %arg16: memref<2x6x6x32xf32, #tpu.memory_space<vmem>>, %arg17: memref<32x144xf32, #tpu.memory_space<vmem>>, %arg18: memref<32x288xf32, #tpu.memory_space<vmem>>) attributes {dimension_semantics = [], scalar_prefetch = 0 : i64, scratch_operands = 4 : i64, tpu.core_type = #tpu.core_type<tc>} {
    %c0 = arith.constant 0 : index
    %c0_0 = arith.constant 0 : index
    %c0_1 = arith.constant 0 : index
    %c0_2 = arith.constant 0 : index
    %0 = vector.load %arg0[%c0, %c0_0, %c0_1, %c0_2] : memref<2x8x8x16xf32, #tpu.memory_space<vmem>>, vector<2x8x8x16xf32>
    %1 = vector.shape_cast %0 : vector<2x8x8x16xf32> to vector<128x16xf32>
    %cst = arith.constant dense<0.000000e+00> : vector<16xf32>
    %2 = vector.multi_reduction <add>, %1, %cst [0] : vector<128x16xf32> to vector<16xf32>
    %3 = vector.shape_cast %2 : vector<16xf32> to vector<1x16xf32>
    %4 = arith.mulf %1, %1 : vector<128x16xf32>
    %cst_3 = arith.constant dense<0.000000e+00> : vector<16xf32>
    %5 = vector.multi_reduction <add>, %4, %cst_3 [0] : vector<128x16xf32> to vector<16xf32>
    %6 = vector.shape_cast %5 : vector<16xf32> to vector<1x16xf32>
    %cst_4 = arith.constant 7.812500e-03 : f32
    %7 = vector.broadcast %cst_4 : f32 to vector<1x16xf32>
    %8 = arith.mulf %3, %7 : vector<1x16xf32>
    %cst_5 = arith.constant 7.812500e-03 : f32
    %9 = vector.broadcast %cst_5 : f32 to vector<1x16xf32>
    %10 = arith.mulf %6, %9 : vector<1x16xf32>
    %11 = arith.mulf %8, %8 : vector<1x16xf32>
    %12 = arith.subf %10, %11 : vector<1x16xf32>
    %cst_6 = arith.constant 0.000000e+00 : f32
    %13 = vector.broadcast %cst_6 : f32 to vector<1x16xf32>
    %14 = arith.maximumf %12, %13 : vector<1x16xf32>
    %c0_7 = arith.constant 0 : index
    %c0_8 = arith.constant 0 : index
    %15 = vector.load %arg1[%c0_7, %c0_8] : memref<1x16xf32, #tpu.memory_space<vmem>>, vector<1x16xf32>
    %cst_9 = arith.constant 9.99999974E-6 : f32
    %16 = vector.broadcast %cst_9 : f32 to vector<1x16xf32>
    %17 = arith.addf %14, %16 : vector<1x16xf32>
    %18 = math.rsqrt %17 : vector<1x16xf32>
    %19 = arith.mulf %15, %18 : vector<1x16xf32>
    %c0_10 = arith.constant 0 : index
    %c0_11 = arith.constant 0 : index
    %20 = vector.load %arg2[%c0_10, %c0_11] : memref<1x16xf32, #tpu.memory_space<vmem>>, vector<1x16xf32>
    %21 = arith.mulf %8, %19 : vector<1x16xf32>
    %22 = arith.subf %20, %21 : vector<1x16xf32>
    %23 = vector.broadcast %19 : vector<1x16xf32> to vector<128x16xf32>
    %24 = arith.mulf %1, %23 : vector<128x16xf32>
    %25 = vector.broadcast %22 : vector<1x16xf32> to vector<128x16xf32>
    %26 = arith.addf %24, %25 : vector<128x16xf32>
    %cst_12 = arith.constant 0.000000e+00 : f32
    %27 = vector.broadcast %cst_12 : f32 to vector<128x16xf32>
    %28 = arith.maximumf %26, %27 : vector<128x16xf32>
    %29 = vector.shape_cast %28 : vector<128x16xf32> to vector<2x8x8x16xf32>
    %cst_13 = arith.constant 0.000000e+00 : f32
    %30 = vector.broadcast %cst_13 : f32 to vector<2x1x10x16xf32>
    %c0_14 = arith.constant 0 : index
    %c0_15 = arith.constant 0 : index
    %c0_16 = arith.constant 0 : index
    %c0_17 = arith.constant 0 : index
    %31 = vector.load %arg15[%c0_14, %c0_15, %c0_16, %c0_17] : memref<2x10x10x16xf32, #tpu.memory_space<vmem>>, vector<2x1x10x16xf32>
    tpu.vector_store %arg15[%c0_14, %c0_15, %c0_16, %c0_17], %30 {strides = array<i32>} : memref<2x10x10x16xf32, #tpu.memory_space<vmem>>, vector<2x1x10x16xf32>,
    %cst_18 = arith.constant 0.000000e+00 : f32
    %32 = vector.broadcast %cst_18 : f32 to vector<2x1x10x16xf32>
    %c0_19 = arith.constant 0 : index
    %c9 = arith.constant 9 : index
    %c0_20 = arith.constant 0 : index
    %c0_21 = arith.constant 0 : index
    %33 = vector.load %arg15[%c0_19, %c9, %c0_20, %c0_21] : memref<2x10x10x16xf32, #tpu.memory_space<vmem>>, vector<2x1x10x16xf32>
    tpu.vector_store %arg15[%c0_19, %c9, %c0_20, %c0_21], %32 {strides = array<i32>} : memref<2x10x10x16xf32, #tpu.memory_space<vmem>>, vector<2x1x10x16xf32>,
    %cst_22 = arith.constant 0.000000e+00 : f32
    %34 = vector.broadcast %cst_22 : f32 to vector<2x8x1x16xf32>
    %c0_23 = arith.constant 0 : index
    %c1 = arith.constant 1 : index
    %c0_24 = arith.constant 0 : index
    %c0_25 = arith.constant 0 : index
    %35 = vector.load %arg15[%c0_23, %c1, %c0_24, %c0_25] : memref<2x10x10x16xf32, #tpu.memory_space<vmem>>, vector<2x8x1x16xf32>
    tpu.vector_store %arg15[%c0_23, %c1, %c0_24, %c0_25], %34 {strides = array<i32>} : memref<2x10x10x16xf32, #tpu.memory_space<vmem>>, vector<2x8x1x16xf32>,
    %cst_26 = arith.constant 0.000000e+00 : f32
    %36 = vector.broadcast %cst_26 : f32 to vector<2x8x1x16xf32>
    %c0_27 = arith.constant 0 : index
    %c1_28 = arith.constant 1 : index
    %c9_29 = arith.constant 9 : index
    %c0_30 = arith.constant 0 : index
    %37 = vector.load %arg15[%c0_27, %c1_28, %c9_29, %c0_30] : memref<2x10x10x16xf32, #tpu.memory_space<vmem>>, vector<2x8x1x16xf32>
    tpu.vector_store %arg15[%c0_27, %c1_28, %c9_29, %c0_30], %36 {strides = array<i32>} : memref<2x10x10x16xf32, #tpu.memory_space<vmem>>, vector<2x8x1x16xf32>,
    %c0_31 = arith.constant 0 : index
    %c1_32 = arith.constant 1 : index
    %c1_33 = arith.constant 1 : index
    %c0_34 = arith.constant 0 : index
    %38 = vector.load %arg15[%c0_31, %c1_32, %c1_33, %c0_34] : memref<2x10x10x16xf32, #tpu.memory_space<vmem>>, vector<2x8x8x16xf32>
    tpu.vector_store %arg15[%c0_31, %c1_32, %c1_33, %c0_34], %29 {strides = array<i32>} : memref<2x10x10x16xf32, #tpu.memory_space<vmem>>, vector<2x8x8x16xf32>,
    %c0_35 = arith.constant 0 : index
    %c0_36 = arith.constant 0 : index
    %c0_37 = arith.constant 0 : index
    %c0_38 = arith.constant 0 : index
    %39 = tpu.strided_load %arg15[%c0_35, %c0_36, %c0_37, %c0_38] {strides = array<i32: 1, 2, 2, 1>} : memref<2x10x10x16xf32, #tpu.memory_space<vmem>>, vector<2x4x4x16xf32>
    %40 = vector.shape_cast %39 : vector<2x4x4x16xf32> to vector<32x16xf32>
    %c0_39 = arith.constant 0 : index
    %c0_40 = arith.constant 0 : index
    %41 = vector.load %arg17[%c0_39, %c0_40] : memref<32x144xf32, #tpu.memory_space<vmem>>, vector<32x16xf32>
    tpu.vector_store %arg17[%c0_39, %c0_40], %40 {strides = array<i32>} : memref<32x144xf32, #tpu.memory_space<vmem>>, vector<32x16xf32>,
    %c0_41 = arith.constant 0 : index
    %c0_42 = arith.constant 0 : index
    %c1_43 = arith.constant 1 : index
    %c0_44 = arith.constant 0 : index
    %42 = tpu.strided_load %arg15[%c0_41, %c0_42, %c1_43, %c0_44] {strides = array<i32: 1, 2, 2, 1>} : memref<2x10x10x16xf32, #tpu.memory_space<vmem>>, vector<2x4x4x16xf32>
    %43 = vector.shape_cast %42 : vector<2x4x4x16xf32> to vector<32x16xf32>
    %c0_45 = arith.constant 0 : index
    %c16 = arith.constant 16 : index
    %44 = vector.load %arg17[%c0_45, %c16] : memref<32x144xf32, #tpu.memory_space<vmem>>, vector<32x16xf32>
    tpu.vector_store %arg17[%c0_45, %c16], %43 {strides = array<i32>} : memref<32x144xf32, #tpu.memory_space<vmem>>, vector<32x16xf32>,
    %c0_46 = arith.constant 0 : index
    %c0_47 = arith.constant 0 : index
    %c2 = arith.constant 2 : index
    %c0_48 = arith.constant 0 : index
    %45 = tpu.strided_load %arg15[%c0_46, %c0_47, %c2, %c0_48] {strides = array<i32: 1, 2, 2, 1>} : memref<2x10x10x16xf32, #tpu.memory_space<vmem>>, vector<2x4x4x16xf32>
    %46 = vector.shape_cast %45 : vector<2x4x4x16xf32> to vector<32x16xf32>
    %c0_49 = arith.constant 0 : index
    %c32 = arith.constant 32 : index
    %47 = vector.load %arg17[%c0_49, %c32] : memref<32x144xf32, #tpu.memory_space<vmem>>, vector<32x16xf32>
    tpu.vector_store %arg17[%c0_49, %c32], %46 {strides = array<i32>} : memref<32x144xf32, #tpu.memory_space<vmem>>, vector<32x16xf32>,
    %c0_50 = arith.constant 0 : index
    %c1_51 = arith.constant 1 : index
    %c0_52 = arith.constant 0 : index
    %c0_53 = arith.constant 0 : index
    %48 = tpu.strided_load %arg15[%c0_50, %c1_51, %c0_52, %c0_53] {strides = array<i32: 1, 2, 2, 1>} : memref<2x10x10x16xf32, #tpu.memory_space<vmem>>, vector<2x4x4x16xf32>
    %49 = vector.shape_cast %48 : vector<2x4x4x16xf32> to vector<32x16xf32>
    %c0_54 = arith.constant 0 : index
    %c48 = arith.constant 48 : index
    %50 = vector.load %arg17[%c0_54, %c48] : memref<32x144xf32, #tpu.memory_space<vmem>>, vector<32x16xf32>
    tpu.vector_store %arg17[%c0_54, %c48], %49 {strides = array<i32>} : memref<32x144xf32, #tpu.memory_space<vmem>>, vector<32x16xf32>,
    %c0_55 = arith.constant 0 : index
    %c1_56 = arith.constant 1 : index
    %c1_57 = arith.constant 1 : index
    %c0_58 = arith.constant 0 : index
    %51 = tpu.strided_load %arg15[%c0_55, %c1_56, %c1_57, %c0_58] {strides = array<i32: 1, 2, 2, 1>} : memref<2x10x10x16xf32, #tpu.memory_space<vmem>>, vector<2x4x4x16xf32>
    %52 = vector.shape_cast %51 : vector<2x4x4x16xf32> to vector<32x16xf32>
    %c0_59 = arith.constant 0 : index
    %c64 = arith.constant 64 : index
    %53 = vector.load %arg17[%c0_59, %c64] : memref<32x144xf32, #tpu.memory_space<vmem>>, vector<32x16xf32>
    tpu.vector_store %arg17[%c0_59, %c64], %52 {strides = array<i32>} : memref<32x144xf32, #tpu.memory_space<vmem>>, vector<32x16xf32>,
    %c0_60 = arith.constant 0 : index
    %c1_61 = arith.constant 1 : index
    %c2_62 = arith.constant 2 : index
    %c0_63 = arith.constant 0 : index
    %54 = tpu.strided_load %arg15[%c0_60, %c1_61, %c2_62, %c0_63] {strides = array<i32: 1, 2, 2, 1>} : memref<2x10x10x16xf32, #tpu.memory_space<vmem>>, vector<2x4x4x16xf32>
    %55 = vector.shape_cast %54 : vector<2x4x4x16xf32> to vector<32x16xf32>
    %c0_64 = arith.constant 0 : index
    %c80 = arith.constant 80 : index
    %56 = vector.load %arg17[%c0_64, %c80] : memref<32x144xf32, #tpu.memory_space<vmem>>, vector<32x16xf32>
    tpu.vector_store %arg17[%c0_64, %c80], %55 {strides = array<i32>} : memref<32x144xf32, #tpu.memory_space<vmem>>, vector<32x16xf32>,
    %c0_65 = arith.constant 0 : index
    %c2_66 = arith.constant 2 : index
    %c0_67 = arith.constant 0 : index
    %c0_68 = arith.constant 0 : index
    %57 = tpu.strided_load %arg15[%c0_65, %c2_66, %c0_67, %c0_68] {strides = array<i32: 1, 2, 2, 1>} : memref<2x10x10x16xf32, #tpu.memory_space<vmem>>, vector<2x4x4x16xf32>
    %58 = vector.shape_cast %57 : vector<2x4x4x16xf32> to vector<32x16xf32>
    %c0_69 = arith.constant 0 : index
    %c96 = arith.constant 96 : index
    %59 = vector.load %arg17[%c0_69, %c96] : memref<32x144xf32, #tpu.memory_space<vmem>>, vector<32x16xf32>
    tpu.vector_store %arg17[%c0_69, %c96], %58 {strides = array<i32>} : memref<32x144xf32, #tpu.memory_space<vmem>>, vector<32x16xf32>,
    %c0_70 = arith.constant 0 : index
    %c2_71 = arith.constant 2 : index
    %c1_72 = arith.constant 1 : index
    %c0_73 = arith.constant 0 : index
    %60 = tpu.strided_load %arg15[%c0_70, %c2_71, %c1_72, %c0_73] {strides = array<i32: 1, 2, 2, 1>} : memref<2x10x10x16xf32, #tpu.memory_space<vmem>>, vector<2x4x4x16xf32>
    %61 = vector.shape_cast %60 : vector<2x4x4x16xf32> to vector<32x16xf32>
    %c0_74 = arith.constant 0 : index
    %c112 = arith.constant 112 : index
    %62 = vector.load %arg17[%c0_74, %c112] : memref<32x144xf32, #tpu.memory_space<vmem>>, vector<32x16xf32>
    tpu.vector_store %arg17[%c0_74, %c112], %61 {strides = array<i32>} : memref<32x144xf32, #tpu.memory_space<vmem>>, vector<32x16xf32>,
    %c0_75 = arith.constant 0 : index
    %c2_76 = arith.constant 2 : index
    %c2_77 = arith.constant 2 : index
    %c0_78 = arith.constant 0 : index
    %63 = tpu.strided_load %arg15[%c0_75, %c2_76, %c2_77, %c0_78] {strides = array<i32: 1, 2, 2, 1>} : memref<2x10x10x16xf32, #tpu.memory_space<vmem>>, vector<2x4x4x16xf32>
    %64 = vector.shape_cast %63 : vector<2x4x4x16xf32> to vector<32x16xf32>
    %c0_79 = arith.constant 0 : index
    %c128 = arith.constant 128 : index
    %65 = vector.load %arg17[%c0_79, %c128] : memref<32x144xf32, #tpu.memory_space<vmem>>, vector<32x16xf32>
    tpu.vector_store %arg17[%c0_79, %c128], %64 {strides = array<i32>} : memref<32x144xf32, #tpu.memory_space<vmem>>, vector<32x16xf32>,
    %c0_80 = arith.constant 0 : index
    %c0_81 = arith.constant 0 : index
    %66 = vector.load %arg17[%c0_80, %c0_81] : memref<32x144xf32, #tpu.memory_space<vmem>>, vector<32x144xf32>
    %c0_82 = arith.constant 0 : index
    %c0_83 = arith.constant 0 : index
    %67 = vector.load %arg3[%c0_82, %c0_83] : memref<144x32xf32, #tpu.memory_space<vmem>>, vector<144x32xf32>
    %cst_84 = arith.constant dense<0.000000e+00> : vector<32x32xf32>
    %68 = tpu.matmul %66, %67, %cst_84 {dimension_numbers = #tpu.dot_dimension_numbers<[1], [0], [0], [1], [0, 0, 1, 1], [], []>} : vector<32x144xf32>, vector<144x32xf32>, vector<32x32xf32> -> vector<32x32xf32>
    %cst_85 = arith.constant dense<0.000000e+00> : vector<32xf32>
    %69 = vector.multi_reduction <add>, %68, %cst_85 [0] : vector<32x32xf32> to vector<32xf32>
    %70 = vector.shape_cast %69 : vector<32xf32> to vector<1x32xf32>
    %71 = arith.mulf %68, %68 : vector<32x32xf32>
    %cst_86 = arith.constant dense<0.000000e+00> : vector<32xf32>
    %72 = vector.multi_reduction <add>, %71, %cst_86 [0] : vector<32x32xf32> to vector<32xf32>
    %73 = vector.shape_cast %72 : vector<32xf32> to vector<1x32xf32>
    %cst_87 = arith.constant 3.125000e-02 : f32
    %74 = vector.broadcast %cst_87 : f32 to vector<1x32xf32>
    %75 = arith.mulf %70, %74 : vector<1x32xf32>
    %cst_88 = arith.constant 3.125000e-02 : f32
    %76 = vector.broadcast %cst_88 : f32 to vector<1x32xf32>
    %77 = arith.mulf %73, %76 : vector<1x32xf32>
    %78 = arith.mulf %75, %75 : vector<1x32xf32>
    %79 = arith.subf %77, %78 : vector<1x32xf32>
    %cst_89 = arith.constant 0.000000e+00 : f32
    %80 = vector.broadcast %cst_89 : f32 to vector<1x32xf32>
    %81 = arith.maximumf %79, %80 : vector<1x32xf32>
    %c0_90 = arith.constant 0 : index
    %c0_91 = arith.constant 0 : index
    %82 = vector.load %arg4[%c0_90, %c0_91] : memref<1x32xf32, #tpu.memory_space<vmem>>, vector<1x32xf32>
    %cst_92 = arith.constant 9.99999974E-6 : f32
    %83 = vector.broadcast %cst_92 : f32 to vector<1x32xf32>
    %84 = arith.addf %81, %83 : vector<1x32xf32>
    %85 = math.rsqrt %84 : vector<1x32xf32>
    %86 = arith.mulf %82, %85 : vector<1x32xf32>
    %c0_93 = arith.constant 0 : index
    %c0_94 = arith.constant 0 : index
    %87 = vector.load %arg5[%c0_93, %c0_94] : memref<1x32xf32, #tpu.memory_space<vmem>>, vector<1x32xf32>
    %88 = arith.mulf %75, %86 : vector<1x32xf32>
    %89 = arith.subf %87, %88 : vector<1x32xf32>
    %90 = vector.broadcast %86 : vector<1x32xf32> to vector<32x32xf32>
    %91 = arith.mulf %68, %90 : vector<32x32xf32>
    %92 = vector.broadcast %89 : vector<1x32xf32> to vector<32x32xf32>
    %93 = arith.addf %91, %92 : vector<32x32xf32>
    %cst_95 = arith.constant 0.000000e+00 : f32
    %94 = vector.broadcast %cst_95 : f32 to vector<32x32xf32>
    %95 = arith.maximumf %93, %94 : vector<32x32xf32>
    %96 = vector.shape_cast %95 : vector<32x32xf32> to vector<2x4x4x32xf32>
    %cst_96 = arith.constant 0.000000e+00 : f32
    %97 = vector.broadcast %cst_96 : f32 to vector<2x1x6x32xf32>
    %c0_97 = arith.constant 0 : index
    %c0_98 = arith.constant 0 : index
    %c0_99 = arith.constant 0 : index
    %c0_100 = arith.constant 0 : index
    %98 = vector.load %arg16[%c0_97, %c0_98, %c0_99, %c0_100] : memref<2x6x6x32xf32, #tpu.memory_space<vmem>>, vector<2x1x6x32xf32>
    tpu.vector_store %arg16[%c0_97, %c0_98, %c0_99, %c0_100], %97 {strides = array<i32>} : memref<2x6x6x32xf32, #tpu.memory_space<vmem>>, vector<2x1x6x32xf32>,
    %cst_101 = arith.constant 0.000000e+00 : f32
    %99 = vector.broadcast %cst_101 : f32 to vector<2x1x6x32xf32>
    %c0_102 = arith.constant 0 : index
    %c5 = arith.constant 5 : index
    %c0_103 = arith.constant 0 : index
    %c0_104 = arith.constant 0 : index
    %100 = vector.load %arg16[%c0_102, %c5, %c0_103, %c0_104] : memref<2x6x6x32xf32, #tpu.memory_space<vmem>>, vector<2x1x6x32xf32>
    tpu.vector_store %arg16[%c0_102, %c5, %c0_103, %c0_104], %99 {strides = array<i32>} : memref<2x6x6x32xf32, #tpu.memory_space<vmem>>, vector<2x1x6x32xf32>,
    %cst_105 = arith.constant 0.000000e+00 : f32
    %101 = vector.broadcast %cst_105 : f32 to vector<2x4x1x32xf32>
    %c0_106 = arith.constant 0 : index
    %c1_107 = arith.constant 1 : index
    %c0_108 = arith.constant 0 : index
    %c0_109 = arith.constant 0 : index
    %102 = vector.load %arg16[%c0_106, %c1_107, %c0_108, %c0_109] : memref<2x6x6x32xf32, #tpu.memory_space<vmem>>, vector<2x4x1x32xf32>
    tpu.vector_store %arg16[%c0_106, %c1_107, %c0_108, %c0_109], %101 {strides = array<i32>} : memref<2x6x6x32xf32, #tpu.memory_space<vmem>>, vector<2x4x1x32xf32>,
    %cst_110 = arith.constant 0.000000e+00 : f32
    %103 = vector.broadcast %cst_110 : f32 to vector<2x4x1x32xf32>
    %c0_111 = arith.constant 0 : index
    %c1_112 = arith.constant 1 : index
    %c5_113 = arith.constant 5 : index
    %c0_114 = arith.constant 0 : index
    %104 = vector.load %arg16[%c0_111, %c1_112, %c5_113, %c0_114] : memref<2x6x6x32xf32, #tpu.memory_space<vmem>>, vector<2x4x1x32xf32>
    tpu.vector_store %arg16[%c0_111, %c1_112, %c5_113, %c0_114], %103 {strides = array<i32>} : memref<2x6x6x32xf32, #tpu.memory_space<vmem>>, vector<2x4x1x32xf32>,
    %c0_115 = arith.constant 0 : index
    %c1_116 = arith.constant 1 : index
    %c1_117 = arith.constant 1 : index
    %c0_118 = arith.constant 0 : index
    %105 = vector.load %arg16[%c0_115, %c1_116, %c1_117, %c0_118] : memref<2x6x6x32xf32, #tpu.memory_space<vmem>>, vector<2x4x4x32xf32>
    tpu.vector_store %arg16[%c0_115, %c1_116, %c1_117, %c0_118], %96 {strides = array<i32>} : memref<2x6x6x32xf32, #tpu.memory_space<vmem>>, vector<2x4x4x32xf32>,
    %c0_119 = arith.constant 0 : index
    %c0_120 = arith.constant 0 : index
    %c0_121 = arith.constant 0 : index
    %c0_122 = arith.constant 0 : index
    %106 = vector.load %arg16[%c0_119, %c0_120, %c0_121, %c0_122] : memref<2x6x6x32xf32, #tpu.memory_space<vmem>>, vector<2x4x4x32xf32>
    %107 = vector.shape_cast %106 : vector<2x4x4x32xf32> to vector<32x32xf32>
    %c0_123 = arith.constant 0 : index
    %c0_124 = arith.constant 0 : index
    %108 = vector.load %arg18[%c0_123, %c0_124] : memref<32x288xf32, #tpu.memory_space<vmem>>, vector<32x32xf32>
    tpu.vector_store %arg18[%c0_123, %c0_124], %107 {strides = array<i32>} : memref<32x288xf32, #tpu.memory_space<vmem>>, vector<32x32xf32>,
    %c0_125 = arith.constant 0 : index
    %c0_126 = arith.constant 0 : index
    %c1_127 = arith.constant 1 : index
    %c0_128 = arith.constant 0 : index
    %109 = vector.load %arg16[%c0_125, %c0_126, %c1_127, %c0_128] : memref<2x6x6x32xf32, #tpu.memory_space<vmem>>, vector<2x4x4x32xf32>
    %110 = vector.shape_cast %109 : vector<2x4x4x32xf32> to vector<32x32xf32>
    %c0_129 = arith.constant 0 : index
    %c32_130 = arith.constant 32 : index
    %111 = vector.load %arg18[%c0_129, %c32_130] : memref<32x288xf32, #tpu.memory_space<vmem>>, vector<32x32xf32>
    tpu.vector_store %arg18[%c0_129, %c32_130], %110 {strides = array<i32>} : memref<32x288xf32, #tpu.memory_space<vmem>>, vector<32x32xf32>,
    %c0_131 = arith.constant 0 : index
    %c0_132 = arith.constant 0 : index
    %c2_133 = arith.constant 2 : index
    %c0_134 = arith.constant 0 : index
    %112 = vector.load %arg16[%c0_131, %c0_132, %c2_133, %c0_134] : memref<2x6x6x32xf32, #tpu.memory_space<vmem>>, vector<2x4x4x32xf32>
    %113 = vector.shape_cast %112 : vector<2x4x4x32xf32> to vector<32x32xf32>
    %c0_135 = arith.constant 0 : index
    %c64_136 = arith.constant 64 : index
    %114 = vector.load %arg18[%c0_135, %c64_136] : memref<32x288xf32, #tpu.memory_space<vmem>>, vector<32x32xf32>
    tpu.vector_store %arg18[%c0_135, %c64_136], %113 {strides = array<i32>} : memref<32x288xf32, #tpu.memory_space<vmem>>, vector<32x32xf32>,
    %c0_137 = arith.constant 0 : index
    %c1_138 = arith.constant 1 : index
    %c0_139 = arith.constant 0 : index
    %c0_140 = arith.constant 0 : index
    %115 = vector.load %arg16[%c0_137, %c1_138, %c0_139, %c0_140] : memref<2x6x6x32xf32, #tpu.memory_space<vmem>>, vector<2x4x4x32xf32>
    %116 = vector.shape_cast %115 : vector<2x4x4x32xf32> to vector<32x32xf32>
    %c0_141 = arith.constant 0 : index
    %c96_142 = arith.constant 96 : index
    %117 = vector.load %arg18[%c0_141, %c96_142] : memref<32x288xf32, #tpu.memory_space<vmem>>, vector<32x32xf32>
    tpu.vector_store %arg18[%c0_141, %c96_142], %116 {strides = array<i32>} : memref<32x288xf32, #tpu.memory_space<vmem>>, vector<32x32xf32>,
    %c0_143 = arith.constant 0 : index
    %c1_144 = arith.constant 1 : index
    %c1_145 = arith.constant 1 : index
    %c0_146 = arith.constant 0 : index
    %118 = vector.load %arg16[%c0_143, %c1_144, %c1_145, %c0_146] : memref<2x6x6x32xf32, #tpu.memory_space<vmem>>, vector<2x4x4x32xf32>
    %119 = vector.shape_cast %118 : vector<2x4x4x32xf32> to vector<32x32xf32>
    %c0_147 = arith.constant 0 : index
    %c128_148 = arith.constant 128 : index
    %120 = vector.load %arg18[%c0_147, %c128_148] : memref<32x288xf32, #tpu.memory_space<vmem>>, vector<32x32xf32>
    tpu.vector_store %arg18[%c0_147, %c128_148], %119 {strides = array<i32>} : memref<32x288xf32, #tpu.memory_space<vmem>>, vector<32x32xf32>,
    %c0_149 = arith.constant 0 : index
    %c1_150 = arith.constant 1 : index
    %c2_151 = arith.constant 2 : index
    %c0_152 = arith.constant 0 : index
    %121 = vector.load %arg16[%c0_149, %c1_150, %c2_151, %c0_152] : memref<2x6x6x32xf32, #tpu.memory_space<vmem>>, vector<2x4x4x32xf32>
    %122 = vector.shape_cast %121 : vector<2x4x4x32xf32> to vector<32x32xf32>
    %c0_153 = arith.constant 0 : index
    %c160 = arith.constant 160 : index
    %123 = vector.load %arg18[%c0_153, %c160] : memref<32x288xf32, #tpu.memory_space<vmem>>, vector<32x32xf32>
    tpu.vector_store %arg18[%c0_153, %c160], %122 {strides = array<i32>} : memref<32x288xf32, #tpu.memory_space<vmem>>, vector<32x32xf32>,
    %c0_154 = arith.constant 0 : index
    %c2_155 = arith.constant 2 : index
    %c0_156 = arith.constant 0 : index
    %c0_157 = arith.constant 0 : index
    %124 = vector.load %arg16[%c0_154, %c2_155, %c0_156, %c0_157] : memref<2x6x6x32xf32, #tpu.memory_space<vmem>>, vector<2x4x4x32xf32>
    %125 = vector.shape_cast %124 : vector<2x4x4x32xf32> to vector<32x32xf32>
    %c0_158 = arith.constant 0 : index
    %c192 = arith.constant 192 : index
    %126 = vector.load %arg18[%c0_158, %c192] : memref<32x288xf32, #tpu.memory_space<vmem>>, vector<32x32xf32>
    tpu.vector_store %arg18[%c0_158, %c192], %125 {strides = array<i32>} : memref<32x288xf32, #tpu.memory_space<vmem>>, vector<32x32xf32>,
    %c0_159 = arith.constant 0 : index
    %c2_160 = arith.constant 2 : index
    %c1_161 = arith.constant 1 : index
    %c0_162 = arith.constant 0 : index
    %127 = vector.load %arg16[%c0_159, %c2_160, %c1_161, %c0_162] : memref<2x6x6x32xf32, #tpu.memory_space<vmem>>, vector<2x4x4x32xf32>
    %128 = vector.shape_cast %127 : vector<2x4x4x32xf32> to vector<32x32xf32>
    %c0_163 = arith.constant 0 : index
    %c224 = arith.constant 224 : index
    %129 = vector.load %arg18[%c0_163, %c224] : memref<32x288xf32, #tpu.memory_space<vmem>>, vector<32x32xf32>
    tpu.vector_store %arg18[%c0_163, %c224], %128 {strides = array<i32>} : memref<32x288xf32, #tpu.memory_space<vmem>>, vector<32x32xf32>,
    %c0_164 = arith.constant 0 : index
    %c2_165 = arith.constant 2 : index
    %c2_166 = arith.constant 2 : index
    %c0_167 = arith.constant 0 : index
    %130 = vector.load %arg16[%c0_164, %c2_165, %c2_166, %c0_167] : memref<2x6x6x32xf32, #tpu.memory_space<vmem>>, vector<2x4x4x32xf32>
    %131 = vector.shape_cast %130 : vector<2x4x4x32xf32> to vector<32x32xf32>
    %c0_168 = arith.constant 0 : index
    %c256 = arith.constant 256 : index
    %132 = vector.load %arg18[%c0_168, %c256] : memref<32x288xf32, #tpu.memory_space<vmem>>, vector<32x32xf32>
    tpu.vector_store %arg18[%c0_168, %c256], %131 {strides = array<i32>} : memref<32x288xf32, #tpu.memory_space<vmem>>, vector<32x32xf32>,
    %c0_169 = arith.constant 0 : index
    %c0_170 = arith.constant 0 : index
    %133 = vector.load %arg18[%c0_169, %c0_170] : memref<32x288xf32, #tpu.memory_space<vmem>>, vector<32x288xf32>
    %c0_171 = arith.constant 0 : index
    %c0_172 = arith.constant 0 : index
    %134 = vector.load %arg6[%c0_171, %c0_172] : memref<288x32xf32, #tpu.memory_space<vmem>>, vector<288x32xf32>
    %cst_173 = arith.constant dense<0.000000e+00> : vector<32x32xf32>
    %135 = tpu.matmul %133, %134, %cst_173 {dimension_numbers = #tpu.dot_dimension_numbers<[1], [0], [0], [1], [0, 0, 1, 1], [], []>} : vector<32x288xf32>, vector<288x32xf32>, vector<32x32xf32> -> vector<32x32xf32>
    %c0_174 = arith.constant 0 : index
    %c0_175 = arith.constant 0 : index
    %c0_176 = arith.constant 0 : index
    %c0_177 = arith.constant 0 : index
    %136 = tpu.strided_load %arg0[%c0_174, %c0_175, %c0_176, %c0_177] {strides = array<i32: 1, 2, 2, 1>} : memref<2x8x8x16xf32, #tpu.memory_space<vmem>>, vector<2x4x4x16xf32>
    %137 = vector.shape_cast %136 : vector<2x4x4x16xf32> to vector<32x16xf32>
    %c0_178 = arith.constant 0 : index
    %c0_179 = arith.constant 0 : index
    %138 = vector.load %arg11[%c0_178, %c0_179] : memref<16x32xf32, #tpu.memory_space<vmem>>, vector<16x32xf32>
    %cst_180 = arith.constant dense<0.000000e+00> : vector<32x32xf32>
    %139 = tpu.matmul %137, %138, %cst_180 {dimension_numbers = #tpu.dot_dimension_numbers<[1], [0], [0], [1], [0, 0, 1, 1], [], []>} : vector<32x16xf32>, vector<16x32xf32>, vector<32x32xf32> -> vector<32x32xf32>
    %cst_181 = arith.constant dense<0.000000e+00> : vector<32xf32>
    %140 = vector.multi_reduction <add>, %139, %cst_181 [0] : vector<32x32xf32> to vector<32xf32>
    %141 = vector.shape_cast %140 : vector<32xf32> to vector<1x32xf32>
    %142 = arith.mulf %139, %139 : vector<32x32xf32>
    %cst_182 = arith.constant dense<0.000000e+00> : vector<32xf32>
    %143 = vector.multi_reduction <add>, %142, %cst_182 [0] : vector<32x32xf32> to vector<32xf32>
    %144 = vector.shape_cast %143 : vector<32xf32> to vector<1x32xf32>
    %cst_183 = arith.constant 3.125000e-02 : f32
    %145 = vector.broadcast %cst_183 : f32 to vector<1x32xf32>
    %146 = arith.mulf %141, %145 : vector<1x32xf32>
    %cst_184 = arith.constant 3.125000e-02 : f32
    %147 = vector.broadcast %cst_184 : f32 to vector<1x32xf32>
    %148 = arith.mulf %144, %147 : vector<1x32xf32>
    %149 = arith.mulf %146, %146 : vector<1x32xf32>
    %150 = arith.subf %148, %149 : vector<1x32xf32>
    %cst_185 = arith.constant 0.000000e+00 : f32
    %151 = vector.broadcast %cst_185 : f32 to vector<1x32xf32>
    %152 = arith.maximumf %150, %151 : vector<1x32xf32>
    %c0_186 = arith.constant 0 : index
    %c0_187 = arith.constant 0 : index
    %153 = vector.load %arg12[%c0_186, %c0_187] : memref<1x32xf32, #tpu.memory_space<vmem>>, vector<1x32xf32>
    %cst_188 = arith.constant 9.99999974E-6 : f32
    %154 = vector.broadcast %cst_188 : f32 to vector<1x32xf32>
    %155 = arith.addf %152, %154 : vector<1x32xf32>
    %156 = math.rsqrt %155 : vector<1x32xf32>
    %157 = arith.mulf %153, %156 : vector<1x32xf32>
    %c0_189 = arith.constant 0 : index
    %c0_190 = arith.constant 0 : index
    %158 = vector.load %arg13[%c0_189, %c0_190] : memref<1x32xf32, #tpu.memory_space<vmem>>, vector<1x32xf32>
    %159 = arith.mulf %146, %157 : vector<1x32xf32>
    %160 = arith.subf %158, %159 : vector<1x32xf32>
    %161 = vector.broadcast %157 : vector<1x32xf32> to vector<32x32xf32>
    %162 = arith.mulf %139, %161 : vector<32x32xf32>
    %163 = vector.broadcast %160 : vector<1x32xf32> to vector<32x32xf32>
    %164 = arith.addf %162, %163 : vector<32x32xf32>
    %165 = vector.shape_cast %135 : vector<32x32xf32> to vector<2x16x32xf32>
    %cst_191 = arith.constant dense<0.000000e+00> : vector<2x32xf32>
    %166 = vector.multi_reduction <add>, %165, %cst_191 [1] : vector<2x16x32xf32> to vector<2x32xf32>
    %cst_192 = arith.constant 1.600000e+01 : f32
    %167 = vector.broadcast %cst_192 : f32 to vector<2x32xf32>
    %168 = arith.divf %166, %167 : vector<2x32xf32>
    %c0_193 = arith.constant 0 : index
    %c0_194 = arith.constant 0 : index
    %169 = vector.load %arg7[%c0_193, %c0_194] : memref<32x2xf32, #tpu.memory_space<vmem>>, vector<32x2xf32>
    %cst_195 = arith.constant dense<0.000000e+00> : vector<2x2xf32>
    %170 = tpu.matmul %168, %169, %cst_195 {dimension_numbers = #tpu.dot_dimension_numbers<[1], [0], [0], [1], [0, 0, 1, 1], [], []>} : vector<2x32xf32>, vector<32x2xf32>, vector<2x2xf32> -> vector<2x2xf32>
    %c0_196 = arith.constant 0 : index
    %c0_197 = arith.constant 0 : index
    %171 = vector.load %arg8[%c0_196, %c0_197] : memref<1x2xf32, #tpu.memory_space<vmem>>, vector<1x2xf32>
    %172 = vector.broadcast %171 : vector<1x2xf32> to vector<2x2xf32>
    %173 = arith.addf %170, %172 : vector<2x2xf32>
    %cst_198 = arith.constant 0.000000e+00 : f32
    %174 = vector.broadcast %cst_198 : f32 to vector<2x2xf32>
    %175 = arith.maximumf %173, %174 : vector<2x2xf32>
    %c0_199 = arith.constant 0 : index
    %c0_200 = arith.constant 0 : index
    %176 = vector.load %arg9[%c0_199, %c0_200] : memref<2x32xf32, #tpu.memory_space<vmem>>, vector<2x32xf32>
    %cst_201 = arith.constant dense<0.000000e+00> : vector<2x32xf32>
    %177 = tpu.matmul %175, %176, %cst_201 {dimension_numbers = #tpu.dot_dimension_numbers<[1], [0], [0], [1], [0, 0, 1, 1], [], []>} : vector<2x2xf32>, vector<2x32xf32>, vector<2x32xf32> -> vector<2x32xf32>
    %c0_202 = arith.constant 0 : index
    %c0_203 = arith.constant 0 : index
    %178 = vector.load %arg10[%c0_202, %c0_203] : memref<1x32xf32, #tpu.memory_space<vmem>>, vector<1x32xf32>
    %179 = vector.broadcast %178 : vector<1x32xf32> to vector<2x32xf32>
    %180 = arith.addf %177, %179 : vector<2x32xf32>
    %cst_204 = arith.constant 0.000000e+00 : f32
    %181 = vector.broadcast %cst_204 : f32 to vector<2x32xf32>
    %182 = arith.subf %181, %180 : vector<2x32xf32>
    %183 = math.exp %182 : vector<2x32xf32>
    %cst_205 = arith.constant 1.000000e+00 : f32
    %184 = vector.broadcast %cst_205 : f32 to vector<2x32xf32>
    %185 = arith.addf %184, %183 : vector<2x32xf32>
    %186 = tpu.reciprocal %185 {approx = true} : vector<2x32xf32> -> vector<2x32xf32>
    %187 = vector.shape_cast %135 : vector<32x32xf32> to vector<2x4x4x32xf32>
    %188 = vector.shape_cast %186 : vector<2x32xf32> to vector<2x1x1x32xf32>
    %189 = vector.broadcast %188 : vector<2x1x1x32xf32> to vector<2x4x4x32xf32>
    %190 = arith.mulf %187, %189 : vector<2x4x4x32xf32>
    %191 = vector.shape_cast %164 : vector<32x32xf32> to vector<2x4x4x32xf32>
    %192 = arith.addf %190, %191 : vector<2x4x4x32xf32>
    %193 = vector.shape_cast %192 : vector<2x4x4x32xf32> to vector<8x128xf32>
    %c0_206 = arith.constant 0 : index
    %c0_207 = arith.constant 0 : index
    %194 = vector.load %arg14[%c0_206, %c0_207] : memref<8x128xf32, #tpu.memory_space<vmem>>, vector<8x128xf32>
    tpu.vector_store %arg14[%c0_206, %c0_207], %193 {strides = array<i32>} : memref<8x128xf32, #tpu.memory_space<vmem>>, vector<8x128xf32>,
    return
  }
}

</mosaic_0001>

<llo_original>
// kernel: tpu_custom_call.1
$region0: #{tpu_custom_call.1}
  #allocation0 [shape = 'u32[]', space=smem, size = 0x4, offset = 0x4, fixed_abs, tag = 'smem constant byte address 0x4 - core index']
  #allocation1 [shape = 'u32[144,128]{1,0:T(1,128)}', space=vmem, size = 0x12000, scoped, tag = 'internal scratch']
  #allocation2 [shape = 'f32[2,10,10,16]{3,2,1,0:T(8,128)}', space=vmem, size = 0x28000, scoped, tag = 'scratch operand']
  #allocation3 [shape = 'f32[2,6,6,32]{3,2,1,0:T(8,128)}', space=vmem, size = 0xc000, scoped, tag = 'scratch operand']
  #allocation4 [shape = 'f32[32,144]{1,0:T(8,128)}', space=vmem, size = 0x8000, scoped, tag = 'scratch operand']
  #allocation5 [shape = 'f32[32,288]{1,0:T(8,128)}', space=vmem, size = 0xc000, scoped, tag = 'scratch operand']
  %s0 = inlined_call_operand.vmem [shape: f32[2,8,8,16], index: 0, kind: input, shape index: {}]
  %s1 = inlined_call_operand.vmem [shape: f32[1,16], index: 1, kind: input, shape index: {}]
  %s2 = inlined_call_operand.vmem [shape: f32[1,16], index: 2, kind: input, shape index: {}]
  %s3 = inlined_call_operand.vmem [shape: f32[144,32], index: 3, kind: input, shape index: {}]
  %s4 = inlined_call_operand.vmem [shape: f32[1,32], index: 4, kind: input, shape index: {}]
  %s5 = inlined_call_operand.vmem [shape: f32[1,32], index: 5, kind: input, shape index: {}]
  %s6 = inlined_call_operand.vmem [shape: f32[288,32], index: 6, kind: input, shape index: {}]
  %s7 = inlined_call_operand.vmem [shape: f32[32,2], index: 7, kind: input, shape index: {}]
  %s8 = inlined_call_operand.vmem [shape: f32[1,2], index: 8, kind: input, shape index: {}]
  %s9 = inlined_call_operand.vmem [shape: f32[2,32], index: 9, kind: input, shape index: {}]
  %s10 = inlined_call_operand.vmem [shape: f32[1,32], index: 10, kind: input, shape index: {}]
  %s11 = inlined_call_operand.vmem [shape: f32[16,32], index: 11, kind: input, shape index: {}]
  %s12 = inlined_call_operand.vmem [shape: f32[1,32], index: 12, kind: input, shape index: {}]
  %s13 = inlined_call_operand.vmem [shape: f32[1,32], index: 13, kind: input, shape index: {}]
  %s14 = inlined_call_operand.hbm [shape: f32[8,128], index: 14, kind: output, shape index: {}]
  %s15 = sld [smem:[#allocation0]]
  $region66: #{tpu_custom_call.1} parent=0
    _
  %s17 = ssub.s32 1, %s15
  %s18 = scalar_select 0, %s17, %s15
  $region1: #{tpu_custom_call.1} parent=0
    #allocation6 [shape = 'u8[4096]{0}', space=vmem, size = 0x1000, scoped, tag = 'output window, operand 0, single buffered']
    #allocation7 [shape = 's32[1]{0}', space=sflag, size = 0x4, scoped, tag = 'scoped memory for tpu_custom_call.1']
    %19 = vsyncpa [#allocation7], 0
    // Predicated region
    $region2: #{tpu_custom_call.1} parent=1 // pred_check
      _
    $region3: #{tpu_custom_call.1} parent=1 // pred_check_branch
      %21 = sbr.rel (0) target = $region5
    $region4: #{tpu_custom_call.1} parent=1 // pred_region
      _
    $region5: #{tpu_custom_call.1} parent=1 // pred_fallthru
      _
    // Predicated region
    $region6: #{tpu_custom_call.1} parent=1 // pred_check
      _
    $region7: #{tpu_custom_call.1} parent=1 // pred_check_branch
      %23 = sbr.rel (0) target = $region9
    $region8: #{tpu_custom_call.1} parent=1 // pred_region
      _
    $region9: #{tpu_custom_call.1} parent=1 // pred_fallthru
      _
    // Predicated region
    $region10: #{tpu_custom_call.1} parent=1 // pred_check
      _
    $region11: #{tpu_custom_call.1} parent=1 // pred_check_branch
      %25 = sbr.rel (0) target = $region13
    $region12: #{tpu_custom_call.1} parent=1 // pred_region
      _
    $region13: #{tpu_custom_call.1} parent=1 // pred_fallthru
      _
    // Predicated region
    $region14: #{tpu_custom_call.1} parent=1 // pred_check
      _
    $region15: #{tpu_custom_call.1} parent=1 // pred_check_branch
      %27 = sbr.rel (0) target = $region17
    $region16: #{tpu_custom_call.1} parent=1 // pred_region
      _
    $region17: #{tpu_custom_call.1} parent=1 // pred_fallthru
      _
    // Predicated region
    $region18: #{tpu_custom_call.1} parent=1 // pred_check
      _
    $region19: #{tpu_custom_call.1} parent=1 // pred_check_branch
      %29 = sbr.rel (0) target = $region21
    $region20: #{tpu_custom_call.1} parent=1 // pred_region
      _
    $region21: #{tpu_custom_call.1} parent=1 // pred_fallthru
      _
    // Predicated region
    $region22: #{tpu_custom_call.1} parent=1 // pred_check
      _
    $region23: #{tpu_custom_call.1} parent=1 // pred_check_branch
      %31 = sbr.rel (0) target = $region25
    $region24: #{tpu_custom_call.1} parent=1 // pred_region
      _
    $region25: #{tpu_custom_call.1} parent=1 // pred_fallthru
      _
    // Predicated region
    $region26: #{tpu_custom_call.1} parent=1 // pred_check
      _
    $region27: #{tpu_custom_call.1} parent=1 // pred_check_branch
      %33 = sbr.rel (0) target = $region29
    $region28: #{tpu_custom_call.1} parent=1 // pred_region
      _
    $region29: #{tpu_custom_call.1} parent=1 // pred_fallthru
      _
    // Predicated region
    $region30: #{tpu_custom_call.1} parent=1 // pred_check
      _
    $region31: #{tpu_custom_call.1} parent=1 // pred_check_branch
      %35 = sbr.rel (0) target = $region33
    $region32: #{tpu_custom_call.1} parent=1 // pred_region
      _
    $region33: #{tpu_custom_call.1} parent=1 // pred_fallthru
      _
    // Predicated region
    $region34: #{tpu_custom_call.1} parent=1 // pred_check
      _
    $region35: #{tpu_custom_call.1} parent=1 // pred_check_branch
      %37 = sbr.rel (0) target = $region37
    $region36: #{tpu_custom_call.1} parent=1 // pred_region
      _
    $region37: #{tpu_custom_call.1} parent=1 // pred_fallthru
      _
    // Predicated region
    $region38: #{tpu_custom_call.1} parent=1 // pred_check
      _
    $region39: #{tpu_custom_call.1} parent=1 // pred_check_branch
      %39 = sbr.rel (0) target = $region41
    $region40: #{tpu_custom_call.1} parent=1 // pred_region
      _
    $region41: #{tpu_custom_call.1} parent=1 // pred_fallthru
      _
    // Predicated region
    $region42: #{tpu_custom_call.1} parent=1 // pred_check
      _
    $region43: #{tpu_custom_call.1} parent=1 // pred_check_branch
      %41 = sbr.rel (0) target = $region45
    $region44: #{tpu_custom_call.1} parent=1 // pred_region
      _
    $region45: #{tpu_custom_call.1} parent=1 // pred_fallthru
      _
    // Predicated region
    $region46: #{tpu_custom_call.1} parent=1 // pred_check
      _
    $region47: #{tpu_custom_call.1} parent=1 // pred_check_branch
      %43 = sbr.rel (0) target = $region49
    $region48: #{tpu_custom_call.1} parent=1 // pred_region
      _
    $region49: #{tpu_custom_call.1} parent=1 // pred_fallthru
      _
    // Predicated region
    $region50: #{tpu_custom_call.1} parent=1 // pred_check
      _
    $region51: #{tpu_custom_call.1} parent=1 // pred_check_branch
      %45 = sbr.rel (0) target = $region53
    $region52: #{tpu_custom_call.1} parent=1 // pred_region
      _
    $region53: #{tpu_custom_call.1} parent=1 // pred_fallthru
      _
    // Predicated region
    $region54: #{tpu_custom_call.1} parent=1 // pred_check
      _
    $region55: #{tpu_custom_call.1} parent=1 // pred_check_branch
      %47 = sbr.rel (0) target = $region57
    $region56: #{tpu_custom_call.1} parent=1 // pred_region
      _
    $region57: #{tpu_custom_call.1} parent=1 // pred_fallthru
      _
    %v48 = vld [vmem:[%s0] sm:$0xff]
    %v49 = vld [vmem:[%s0 + $0x8] sm:$0xff]
    %v50 = vld [vmem:[%s0 + $0x10] sm:$0xff]
    %v51 = vld [vmem:[%s0 + $0x18] sm:$0xff]
    %v52 = vld [vmem:[%s0 + $0x20] sm:$0xff]
    %v53 = vld [vmem:[%s0 + $0x28] sm:$0xff]
    %v54 = vld [vmem:[%s0 + $0x30] sm:$0xff]
    %v55 = vld [vmem:[%s0 + $0x38] sm:$0xff]
    %v56 = vld [vmem:[%s0 + $0x40] sm:$0xff]
    %v57 = vld [vmem:[%s0 + $0x48] sm:$0xff]
    %v58 = vld [vmem:[%s0 + $0x50] sm:$0xff]
    %v59 = vld [vmem:[%s0 + $0x58] sm:$0xff]
    %v60 = vld [vmem:[%s0 + $0x60] sm:$0xff]
    %v61 = vld [vmem:[%s0 + $0x68] sm:$0xff]
    %v62 = vld [vmem:[%s0 + $0x70] sm:$0xff]
    %v63 = vld [vmem:[%s0 + $0x78] sm:$0xff]
    %vm64 = vcmask 130048
    %v65 = vsel %vm64, %v48, 0.0
    %v66 = vsel %vm64, %v49, 0.0
    %v67 = vadd.f32 %v65, %v66
    %v68 = vsel %vm64, %v50, 0.0
    %v69 = vadd.f32 %v67, %v68
    %v70 = vsel %vm64, %v51, 0.0
    %v71 = vadd.f32 %v69, %v70
    %v72 = vsel %vm64, %v52, 0.0
    %v73 = vadd.f32 %v71, %v72
    %v74 = vsel %vm64, %v53, 0.0
    %v75 = vadd.f32 %v73, %v74
    %v76 = vsel %vm64, %v54, 0.0
    %v77 = vadd.f32 %v75, %v76
    %v78 = vsel %vm64, %v55, 0.0
    %v79 = vadd.f32 %v77, %v78
    %v80 = vsel %vm64, %v56, 0.0
    %v81 = vadd.f32 %v79, %v80
    %v82 = vsel %vm64, %v57, 0.0
    %v83 = vadd.f32 %v81, %v82
    %v84 = vsel %vm64, %v58, 0.0
    %v85 = vadd.f32 %v83, %v84
    %v86 = vsel %vm64, %v59, 0.0
    %v87 = vadd.f32 %v85, %v86
    %v88 = vsel %vm64, %v60, 0.0
    %v89 = vadd.f32 %v87, %v88
    %v90 = vsel %vm64, %v61, 0.0
    %v91 = vadd.f32 %v89, %v90
    %v92 = vsel %vm64, %v62, 0.0
    %v93 = vadd.f32 %v91, %v92
    %v94 = vsel %vm64, %v63, 0.0
    %v95 = vadd.f32 %v93, %v94
    %v96 = vrot.slane %v95, 4
    %v97 = vadd.f32 %v95, %v96
    %v98 = vrot.slane %v97, 2
    %v99 = vadd.f32 %v97, %v98
    %v100 = vrot.slane %v99, 1
    %v101 = vadd.f32 %v99, %v100
    %v102 = vmul.f32 %v48, %v48
    %v103 = vmul.f32 %v49, %v49
    %v104 = vmul.f32 %v50, %v50
    %v105 = vmul.f32 %v51, %v51
    %v106 = vmul.f32 %v52, %v52
    %v107 = vmul.f32 %v53, %v53
    %v108 = vmul.f32 %v54, %v54
    %v109 = vmul.f32 %v55, %v55
    %v110 = vmul.f32 %v56, %v56
    %v111 = vmul.f32 %v57, %v57
    %v112 = vmul.f32 %v58, %v58
    %v113 = vmul.f32 %v59, %v59
    %v114 = vmul.f32 %v60, %v60
    %v115 = vmul.f32 %v61, %v61
    %v116 = vmul.f32 %v62, %v62
    %v117 = vmul.f32 %v63, %v63
    %v118 = vsel %vm64, %v102, 0.0
    %v119 = vsel %vm64, %v103, 0.0
    %v120 = vadd.f32 %v118, %v119
    %v121 = vsel %vm64, %v104, 0.0
    %v122 = vadd.f32 %v120, %v121
    %v123 = vsel %vm64, %v105, 0.0
    %v124 = vadd.f32 %v122, %v123
    %v125 = vsel %vm64, %v106, 0.0
    %v126 = vadd.f32 %v124, %v125
    %v127 = vsel %vm64, %v107, 0.0
    %v128 = vadd.f32 %v126, %v127
    %v129 = vsel %vm64, %v108, 0.0
    %v130 = vadd.f32 %v128, %v129
    %v131 = vsel %vm64, %v109, 0.0
    %v132 = vadd.f32 %v130, %v131
    %v133 = vsel %vm64, %v110, 0.0
    %v134 = vadd.f32 %v132, %v133
    %v135 = vsel %vm64, %v111, 0.0
    %v136 = vadd.f32 %v134, %v135
    %v137 = vsel %vm64, %v112, 0.0
    %v138 = vadd.f32 %v136, %v137
    %v139 = vsel %vm64, %v113, 0.0
    %v140 = vadd.f32 %v138, %v139
    %v141 = vsel %vm64, %v114, 0.0
    %v142 = vadd.f32 %v140, %v141
    %v143 = vsel %vm64, %v115, 0.0
    %v144 = vadd.f32 %v142, %v143
    %v145 = vsel %vm64, %v116, 0.0
    %v146 = vadd.f32 %v144, %v145
    %v147 = vsel %vm64, %v117, 0.0
    %v148 = vadd.f32 %v146, %v147
    %v149 = vrot.slane %v148, 4
    %v150 = vadd.f32 %v148, %v149
    %v151 = vrot.slane %v150, 2
    %v152 = vadd.f32 %v150, %v151
    %v153 = vrot.slane %v152, 1
    %v154 = vadd.f32 %v152, %v153
    %v155 = vmul.f32 %v101, 0.0078125
    %v156 = vmul.f32 %v154, 0.0078125
    %v157 = vmul.f32 %v155, %v155
    %v158 = vsub.f32 %v156, %v157
    %v159 = vmax.f32 %v158, 0.0
    %v160 = vld [vmem:[%s1] sm:$0x1]
    %v161 = vadd.f32 %v159, 1e-05
    %v162 = vrsqrt.pop %v161
    %v163 = vmul.f32 %v160, %v162
    %v164 = vld [vmem:[%s2] sm:$0x1]
    %v165 = vmul.f32 %v155, %v163
    %v166 = vsub.f32 %v164, %v165
    %v168 = vlaneseq
    %v169 = vshrl.u32 %v168, 7
    %v170 = vsub.s32 0, %v169
    %v171 = vrot.slane %v163, %v170
    %v173 = vmul.f32 %v48, %v171
    %v174 = vmul.f32 %v49, %v171
    %v175 = vmul.f32 %v50, %v171
    %v176 = vmul.f32 %v51, %v171
    %v177 = vmul.f32 %v52, %v171
    %v178 = vmul.f32 %v53, %v171
    %v179 = vmul.f32 %v54, %v171
    %v180 = vmul.f32 %v55, %v171
    %v181 = vmul.f32 %v56, %v171
    %v182 = vmul.f32 %v57, %v171
    %v183 = vmul.f32 %v58, %v171
    %v184 = vmul.f32 %v59, %v171
    %v185 = vmul.f32 %v60, %v171
    %v186 = vmul.f32 %v61, %v171
    %v187 = vmul.f32 %v62, %v171
    %v188 = vmul.f32 %v63, %v171
    %v190 = vlaneseq
    %v191 = vshrl.u32 %v190, 7
    %v192 = vsub.s32 0, %v191
    %v193 = vrot.slane %v166, %v192
    %v195 = vadd.f32 %v173, %v193
    %v196 = vadd.f32 %v174, %v193
    %v197 = vadd.f32 %v175, %v193
    %v198 = vadd.f32 %v176, %v193
    %v199 = vadd.f32 %v177, %v193
    %v200 = vadd.f32 %v178, %v193
    %v201 = vadd.f32 %v179, %v193
    %v202 = vadd.f32 %v180, %v193
    %v203 = vadd.f32 %v181, %v193
    %v204 = vadd.f32 %v182, %v193
    %v205 = vadd.f32 %v183, %v193
    %v206 = vadd.f32 %v184, %v193
    %v207 = vadd.f32 %v185, %v193
    %v208 = vadd.f32 %v186, %v193
    %v209 = vadd.f32 %v187, %v193
    %v210 = vadd.f32 %v188, %v193
    %v211 = vmax.f32 %v195, 0.0
    %v212 = vmax.f32 %v196, 0.0
    %v213 = vmax.f32 %v197, 0.0
    %v214 = vmax.f32 %v198, 0.0
    %v215 = vmax.f32 %v199, 0.0
    %v216 = vmax.f32 %v200, 0.0
    %v217 = vmax.f32 %v201, 0.0
    %v218 = vmax.f32 %v202, 0.0
    %v219 = vmax.f32 %v203, 0.0
    %v220 = vmax.f32 %v204, 0.0
    %v221 = vmax.f32 %v205, 0.0
    %v222 = vmax.f32 %v206, 0.0
    %v223 = vmax.f32 %v207, 0.0
    %v224 = vmax.f32 %v208, 0.0
    %v225 = vmax.f32 %v209, 0.0
    %v226 = vmax.f32 %v210, 0.0
    %227 = vst.msk [vmem:[#allocation2] sm:$0xff] %vm64, 0.0
    %vm228 = vcmask 123904
    %229 = vst.msk [vmem:[#allocation2 + $0x8] sm:$0x3] %vm228, 0.0
    %230 = vst.msk [vmem:[#allocation2 + $0xa0] sm:$0xff] %vm64, 0.0
    %231 = vst.msk [vmem:[#allocation2 + $0xa8] sm:$0x3] %vm228, 0.0
    %s232 = scalar_lea.vmem [#allocation2], 144
    %233 = vst.msk [vmem:[%s232] sm:$0xff] %vm64, 0.0
    %234 = vst.msk [vmem:[%s232 + $0x8] sm:$0x3] %vm228, 0.0
    %235 = vst.msk [vmem:[%s232 + $0xa0] sm:$0xff] %vm64, 0.0
    %236 = vst.msk [vmem:[%s232 + $0xa8] sm:$0x3] %vm228, 0.0
    %s237 = scalar_lea.vmem [#allocation2], 16
    %vm238 = vcmask 122880
    %239 = vst.msk [vmem:[%s237] sm:$0x1] %vm238, 0.0
    %240 = vst.msk [vmem:[%s237 + $0x10] sm:$0x1] %vm238, 0.0
    %241 = vst.msk [vmem:[%s237 + $0x20] sm:$0x1] %vm238, 0.0
    %242 = vst.msk [vmem:[%s237 + $0x30] sm:$0x1] %vm238, 0.0
    %243 = vst.msk [vmem:[%s237 + $0x40] sm:$0x1] %vm238, 0.0
    %244 = vst.msk [vmem:[%s237 + $0x50] sm:$0x1] %vm238, 0.0
    %245 = vst.msk [vmem:[%s237 + $0x60] sm:$0x1] %vm238, 0.0
    %246 = vst.msk [vmem:[%s237 + $0x70] sm:$0x1] %vm238, 0.0
    %247 = vst.msk [vmem:[%s237 + $0xa0] sm:$0x1] %vm238, 0.0
    %248 = vst.msk [vmem:[%s237 + $0xb0] sm:$0x1] %vm238, 0.0
    %249 = vst.msk [vmem:[%s237 + $0xc0] sm:$0x1] %vm238, 0.0
    %250 = vst.msk [vmem:[%s237 + $0xd0] sm:$0x1] %vm238, 0.0
    %251 = vst.msk [vmem:[%s237 + $0xe0] sm:$0x1] %vm238, 0.0
    %252 = vst.msk [vmem:[%s237 + $0xf0] sm:$0x1] %vm238, 0.0
    %253 = vst.msk [vmem:[%s237 + $0x100] sm:$0x1] %vm238, 0.0
    %254 = vst.msk [vmem:[%s237 + $0x110] sm:$0x1] %vm238, 0.0
    %255 = vst.msk [vmem:[%s237 + $0x9] sm:$0x1] %vm238, 0.0
    %256 = vst.msk [vmem:[%s237 + $0x19] sm:$0x1] %vm238, 0.0
    %257 = vst.msk [vmem:[%s237 + $0x29] sm:$0x1] %vm238, 0.0
    %258 = vst.msk [vmem:[%s237 + $0x39] sm:$0x1] %vm238, 0.0
    %259 = vst.msk [vmem:[%s237 + $0x49] sm:$0x1] %vm238, 0.0
    %260 = vst.msk [vmem:[%s237 + $0x59] sm:$0x1] %vm238, 0.0
    %261 = vst.msk [vmem:[%s237 + $0x69] sm:$0x1] %vm238, 0.0
    %262 = vst.msk [vmem:[%s237 + $0x79] sm:$0x1] %vm238, 0.0
    %263 = vst.msk [vmem:[%s237 + $0xa9] sm:$0x1] %vm238, 0.0
    %264 = vst.msk [vmem:[%s237 + $0xb9] sm:$0x1] %vm238, 0.0
    %265 = vst.msk [vmem:[%s237 + $0xc9] sm:$0x1] %vm238, 0.0
    %266 = vst.msk [vmem:[%s237 + $0xd9] sm:$0x1] %vm238, 0.0
    %267 = vst.msk [vmem:[%s237 + $0xe9] sm:$0x1] %vm238, 0.0
    %268 = vst.msk [vmem:[%s237 + $0xf9] sm:$0x1] %vm238, 0.0
    %269 = vst.msk [vmem:[%s237 + $0x109] sm:$0x1] %vm238, 0.0
    %270 = vst.msk [vmem:[%s237 + $0x119] sm:$0x1] %vm238, 0.0
    %271 = vst.msk [vmem:[%s237 + $0x1] sm:$0xff] %vm64, %v211
    %272 = vst.msk [vmem:[%s237 + $0x11] sm:$0xff] %vm64, %v212
    %273 = vst.msk [vmem:[%s237 + $0x21] sm:$0xff] %vm64, %v213
    %274 = vst.msk [vmem:[%s237 + $0x31] sm:$0xff] %vm64, %v214
    %275 = vst.msk [vmem:[%s237 + $0x41] sm:$0xff] %vm64, %v215
    %276 = vst.msk [vmem:[%s237 + $0x51] sm:$0xff] %vm64, %v216
    %277 = vst.msk [vmem:[%s237 + $0x61] sm:$0xff] %vm64, %v217
    %278 = vst.msk [vmem:[%s237 + $0x71] sm:$0xff] %vm64, %v218
    %279 = vst.msk [vmem:[%s237 + $0xa1] sm:$0xff] %vm64, %v219
    %280 = vst.msk [vmem:[%s237 + $0xb1] sm:$0xff] %vm64, %v220
    %281 = vst.msk [vmem:[%s237 + $0xc1] sm:$0xff] %vm64, %v221
    %282 = vst.msk [vmem:[%s237 + $0xd1] sm:$0xff] %vm64, %v222
    %283 = vst.msk [vmem:[%s237 + $0xe1] sm:$0xff] %vm64, %v223
    %284 = vst.msk [vmem:[%s237 + $0xf1] sm:$0xff] %vm64, %v224
    %285 = vst.msk [vmem:[%s237 + $0x101] sm:$0xff] %vm64, %v225
    %286 = vst.msk [vmem:[%s237 + $0x111] sm:$0xff] %vm64, %v226
    %v287 = vld [vmem:[#allocation2] ss:$2 sm:$0xf]
    %s288 = scalar_lea.vmem [#allocation2], 32
    %v289 = vld [vmem:[%s288] ss:$2 sm:$0xf]
    %s290 = scalar_lea.vmem [#allocation2], 64
    %v291 = vld [vmem:[%s290] ss:$2 sm:$0xf]
    %s292 = scalar_lea.vmem [#allocation2], 96
    %v293 = vld [vmem:[%s292] ss:$2 sm:$0xf]
    %s294 = scalar_lea.vmem [#allocation2], 160
    %v295 = vld [vmem:[%s294] ss:$2 sm:$0xf]
    %s296 = scalar_lea.vmem [#allocation2], 192
    %v297 = vld [vmem:[%s296] ss:$2 sm:$0xf]
    %s298 = scalar_lea.vmem [#allocation2], 224
    %v299 = vld [vmem:[%s298] ss:$2 sm:$0xf]
    %s300 = scalar_lea.vmem [#allocation2], 256
    %v301 = vld [vmem:[%s300] ss:$2 sm:$0xf]
    %v310 = vcombine.low %v287, %v289
    %v311 = vcombine.low %v291, %v293
    %v312 = vcombine.low %v295, %v297
    %v313 = vcombine.low %v299, %v301
    %318 = vst.msk [vmem:[#allocation4] sm:$0xff] %vm64, %v310
    %319 = vst.msk [vmem:[#allocation4 + $0x10] sm:$0xff] %vm64, %v311
    %320 = vst.msk [vmem:[#allocation4 + $0x20] sm:$0xff] %vm64, %v312
    %321 = vst.msk [vmem:[#allocation4 + $0x30] sm:$0xff] %vm64, %v313
    %s322 = scalar_lea.vmem [#allocation2], 1
    %v323 = vld [vmem:[%s322] ss:$2 sm:$0xf]
    %s324 = scalar_lea.vmem [#allocation2], 33
    %v325 = vld [vmem:[%s324] ss:$2 sm:$0xf]
    %s326 = scalar_lea.vmem [#allocation2], 65
    %v327 = vld [vmem:[%s326] ss:$2 sm:$0xf]
    %s328 = scalar_lea.vmem [#allocation2], 97
    %v329 = vld [vmem:[%s328] ss:$2 sm:$0xf]
    %s330 = scalar_lea.vmem [#allocation2], 161
    %v331 = vld [vmem:[%s330] ss:$2 sm:$0xf]
    %s332 = scalar_lea.vmem [#allocation2], 193
    %v333 = vld [vmem:[%s332] ss:$2 sm:$0xf]
    %s334 = scalar_lea.vmem [#allocation2], 225
    %v335 = vld [vmem:[%s334] ss:$2 sm:$0xf]
    %s336 = scalar_lea.vmem [#allocation2], 257
    %v337 = vld [vmem:[%s336] ss:$2 sm:$0xf]
    %v346 = vcombine.low %v323, %v325
    %v347 = vcombine.low %v327, %v329
    %v348 = vcombine.low %v331, %v333
    %v349 = vcombine.low %v335, %v337
    %350 = vrot.lane.b32.xlu0 %v346, 16
    %v351 = vpop.permute.xlu0 %350
    %352 = vrot.lane.b32.xlu0 %v347, 16
    %v353 = vpop.permute.xlu0 %352
    %354 = vrot.lane.b32.xlu0 %v348, 16
    %v355 = vpop.permute.xlu0 %354
    %356 = vrot.lane.b32.xlu0 %v349, 16
    %v357 = vpop.permute.xlu0 %356
    %vm362 = vcmask 261248
    %363 = vst.msk [vmem:[#allocation4] sm:$0xff] %vm362, %v351
    %364 = vst.msk [vmem:[#allocation4 + $0x10] sm:$0xff] %vm362, %v353
    %365 = vst.msk [vmem:[#allocation4 + $0x20] sm:$0xff] %vm362, %v355
    %366 = vst.msk [vmem:[#allocation4 + $0x30] sm:$0xff] %vm362, %v357
    %s367 = scalar_lea.vmem [#allocation2], 2
    %v368 = vld [vmem:[%s367] ss:$2 sm:$0xf]
    %s369 = scalar_lea.vmem [#allocation2], 34
    %v370 = vld [vmem:[%s369] ss:$2 sm:$0xf]
    %s371 = scalar_lea.vmem [#allocation2], 66
    %v372 = vld [vmem:[%s371] ss:$2 sm:$0xf]
    %s373 = scalar_lea.vmem [#allocation2], 98
    %v374 = vld [vmem:[%s373] ss:$2 sm:$0xf]
    %s375 = scalar_lea.vmem [#allocation2], 162
    %v376 = vld [vmem:[%s375] ss:$2 sm:$0xf]
    %s377 = scalar_lea.vmem [#allocation2], 194
    %v378 = vld [vmem:[%s377] ss:$2 sm:$0xf]
    %s379 = scalar_lea.vmem [#allocation2], 226
    %v380 = vld [vmem:[%s379] ss:$2 sm:$0xf]
    %s381 = scalar_lea.vmem [#allocation2], 258
    %v382 = vld [vmem:[%s381] ss:$2 sm:$0xf]
    %v391 = vcombine.low %v368, %v370
    %v392 = vcombine.low %v372, %v374
    %v393 = vcombine.low %v376, %v378
    %v394 = vcombine.low %v380, %v382
    %395 = vrot.lane.b32.xlu0 %v391, 32
    %v396 = vpop.permute.xlu0 %395
    %397 = vrot.lane.b32.xlu0 %v392, 32
    %v398 = vpop.permute.xlu0 %397
    %399 = vrot.lane.b32.xlu0 %v393, 32
    %v400 = vpop.permute.xlu0 %399
    %401 = vrot.lane.b32.xlu0 %v394, 32
    %v402 = vpop.permute.xlu0 %401
    %vm407 = vcmask 392448
    %408 = vst.msk [vmem:[#allocation4] sm:$0xff] %vm407, %v396
    %409 = vst.msk [vmem:[#allocation4 + $0x10] sm:$0xff] %vm407, %v398
    %410 = vst.msk [vmem:[#allocation4 + $0x20] sm:$0xff] %vm407, %v400
    %411 = vst.msk [vmem:[#allocation4 + $0x30] sm:$0xff] %vm407, %v402
    %v412 = vld [vmem:[%s237] ss:$2 sm:$0xf]
    %s413 = scalar_lea.vmem %s237, 32 [#allocation2]
    %v414 = vld [vmem:[%s413] ss:$2 sm:$0xf]
    %s415 = scalar_lea.vmem %s237, 64 [#allocation2]
    %v416 = vld [vmem:[%s415] ss:$2 sm:$0xf]
    %s417 = scalar_lea.vmem %s237, 96 [#allocation2]
    %v418 = vld [vmem:[%s417] ss:$2 sm:$0xf]
    %s419 = scalar_lea.vmem %s237, 160 [#allocation2]
    %v420 = vld [vmem:[%s419] ss:$2 sm:$0xf]
    %s421 = scalar_lea.vmem %s237, 192 [#allocation2]
    %v422 = vld [vmem:[%s421] ss:$2 sm:$0xf]
    %s423 = scalar_lea.vmem %s237, 224 [#allocation2]
    %v424 = vld [vmem:[%s423] ss:$2 sm:$0xf]
    %s425 = scalar_lea.vmem %s237, 256 [#allocation2]
    %v426 = vld [vmem:[%s425] ss:$2 sm:$0xf]
    %v435 = vcombine.low %v412, %v414
    %v436 = vcombine.low %v416, %v418
    %v437 = vcombine.low %v420, %v422
    %v438 = vcombine.low %v424, %v426
    %439 = vrot.lane.b32.xlu0 %v435, 48
    %v440 = vpop.permute.xlu0 %439
    %441 = vrot.lane.b32.xlu0 %v436, 48
    %v442 = vpop.permute.xlu0 %441
    %443 = vrot.lane.b32.xlu0 %v437, 48
    %v444 = vpop.permute.xlu0 %443
    %445 = vrot.lane.b32.xlu0 %v438, 48
    %v446 = vpop.permute.xlu0 %445
    %vm451 = vcmask 523648
    %452 = vst.msk [vmem:[#allocation4] sm:$0xff] %vm451, %v440
    %453 = vst.msk [vmem:[#allocation4 + $0x10] sm:$0xff] %vm451, %v442
    %454 = vst.msk [vmem:[#allocation4 + $0x20] sm:$0xff] %vm451, %v444
    %455 = vst.msk [vmem:[#allocation4 + $0x30] sm:$0xff] %vm451, %v446
    %s456 = scalar_lea.vmem %s237, 1 [#allocation2]
    %v457 = vld [vmem:[%s456] ss:$2 sm:$0xf]
    %s458 = scalar_lea.vmem %s237, 33 [#allocation2]
    %v459 = vld [vmem:[%s458] ss:$2 sm:$0xf]
    %s460 = scalar_lea.vmem %s237, 65 [#allocation2]
    %v461 = vld [vmem:[%s460] ss:$2 sm:$0xf]
    %s462 = scalar_lea.vmem %s237, 97 [#allocation2]
    %v463 = vld [vmem:[%s462] ss:$2 sm:$0xf]
    %s464 = scalar_lea.vmem %s237, 161 [#allocation2]
    %v465 = vld [vmem:[%s464] ss:$2 sm:$0xf]
    %s466 = scalar_lea.vmem %s237, 193 [#allocation2]
    %v467 = vld [vmem:[%s466] ss:$2 sm:$0xf]
    %s468 = scalar_lea.vmem %s237, 225 [#allocation2]
    %v469 = vld [vmem:[%s468] ss:$2 sm:$0xf]
    %s470 = scalar_lea.vmem %s237, 257 [#allocation2]
    %v471 = vld [vmem:[%s470] ss:$2 sm:$0xf]
    %v480 = vcombine.low %v457, %v459
    %v481 = vcombine.low %v461, %v463
    %v482 = vcombine.low %v465, %v467
    %v483 = vcombine.low %v469, %v471
    %484 = vrot.lane.b32.xlu0 %v480, 64
    %v485 = vpop.permute.xlu0 %484
    %486 = vrot.lane.b32.xlu0 %v481, 64
    %v487 = vpop.permute.xlu0 %486
    %488 = vrot.lane.b32.xlu0 %v482, 64
    %v489 = vpop.permute.xlu0 %488
    %490 = vrot.lane.b32.xlu0 %v483, 64
    %v491 = vpop.permute.xlu0 %490
    %vm496 = vcmask 654848
    %497 = vst.msk [vmem:[#allocation4] sm:$0xff] %vm496, %v485
    %498 = vst.msk [vmem:[#allocation4 + $0x10] sm:$0xff] %vm496, %v487
    %499 = vst.msk [vmem:[#allocation4 + $0x20] sm:$0xff] %vm496, %v489
    %500 = vst.msk [vmem:[#allocation4 + $0x30] sm:$0xff] %vm496, %v491
    %s501 = scalar_lea.vmem %s237, 2 [#allocation2]
    %v502 = vld [vmem:[%s501] ss:$2 sm:$0xf]
    %s503 = scalar_lea.vmem %s237, 34 [#allocation2]
    %v504 = vld [vmem:[%s503] ss:$2 sm:$0xf]
    %s505 = scalar_lea.vmem %s237, 66 [#allocation2]
    %v506 = vld [vmem:[%s505] ss:$2 sm:$0xf]
    %s507 = scalar_lea.vmem %s237, 98 [#allocation2]
    %v508 = vld [vmem:[%s507] ss:$2 sm:$0xf]
    %s509 = scalar_lea.vmem %s237, 162 [#allocation2]
    %v510 = vld [vmem:[%s509] ss:$2 sm:$0xf]
    %s511 = scalar_lea.vmem %s237, 194 [#allocation2]
    %v512 = vld [vmem:[%s511] ss:$2 sm:$0xf]
    %s513 = scalar_lea.vmem %s237, 226 [#allocation2]
    %v514 = vld [vmem:[%s513] ss:$2 sm:$0xf]
    %s515 = scalar_lea.vmem %s237, 258 [#allocation2]
    %v516 = vld [vmem:[%s515] ss:$2 sm:$0xf]
    %v525 = vcombine.low %v502, %v504
    %v526 = vcombine.low %v506, %v508
    %v527 = vcombine.low %v510, %v512
    %v528 = vcombine.low %v514, %v516
    %529 = vrot.lane.b32.xlu0 %v525, 80
    %v530 = vpop.permute.xlu0 %529
    %531 = vrot.lane.b32.xlu0 %v526, 80
    %v532 = vpop.permute.xlu0 %531
    %533 = vrot.lane.b32.xlu0 %v527, 80
    %v534 = vpop.permute.xlu0 %533
    %535 = vrot.lane.b32.xlu0 %v528, 80
    %v536 = vpop.permute.xlu0 %535
    %vm541 = vcmask 786048
    %542 = vst.msk [vmem:[#allocation4] sm:$0xff] %vm541, %v530
    %543 = vst.msk [vmem:[#allocation4 + $0x10] sm:$0xff] %vm541, %v532
    %544 = vst.msk [vmem:[#allocation4 + $0x20] sm:$0xff] %vm541, %v534
    %545 = vst.msk [vmem:[#allocation4 + $0x30] sm:$0xff] %vm541, %v536
    %s546 = scalar_lea.vmem [#allocation2], 32
    %v547 = vld [vmem:[%s546] ss:$2 sm:$0xf]
    %s548 = scalar_lea.vmem %s546, 32 [#allocation2]
    %v549 = vld [vmem:[%s548] ss:$2 sm:$0xf]
    %s550 = scalar_lea.vmem %s546, 64 [#allocation2]
    %v551 = vld [vmem:[%s550] ss:$2 sm:$0xf]
    %s552 = scalar_lea.vmem %s546, 96 [#allocation2]
    %v553 = vld [vmem:[%s552] ss:$2 sm:$0xf]
    %s554 = scalar_lea.vmem %s546, 160 [#allocation2]
    %v555 = vld [vmem:[%s554] ss:$2 sm:$0xf]
    %s556 = scalar_lea.vmem %s546, 192 [#allocation2]
    %v557 = vld [vmem:[%s556] ss:$2 sm:$0xf]
    %s558 = scalar_lea.vmem %s546, 224 [#allocation2]
    %v559 = vld [vmem:[%s558] ss:$2 sm:$0xf]
    %s560 = scalar_lea.vmem %s546, 256 [#allocation2]
    %v561 = vld [vmem:[%s560] ss:$2 sm:$0xf]
    %v570 = vcombine.low %v547, %v549
    %v571 = vcombine.low %v551, %v553
    %v572 = vcombine.low %v555, %v557
    %v573 = vcombine.low %v559, %v561
    %574 = vrot.lane.b32.xlu0 %v570, 96
    %v575 = vpop.permute.xlu0 %574
    %576 = vrot.lane.b32.xlu0 %v571, 96
    %v577 = vpop.permute.xlu0 %576
    %578 = vrot.lane.b32.xlu0 %v572, 96
    %v579 = vpop.permute.xlu0 %578
    %580 = vrot.lane.b32.xlu0 %v573, 96
    %v581 = vpop.permute.xlu0 %580
    %vm586 = vcmask 917248
    %587 = vst.msk [vmem:[#allocation4] sm:$0xff] %vm586, %v575
    %588 = vst.msk [vmem:[#allocation4 + $0x10] sm:$0xff] %vm586, %v577
    %589 = vst.msk [vmem:[#allocation4 + $0x20] sm:$0xff] %vm586, %v579
    %590 = vst.msk [vmem:[#allocation4 + $0x30] sm:$0xff] %vm586, %v581
    %s591 = scalar_lea.vmem %s546, 1 [#allocation2]
    %v592 = vld [vmem:[%s591] ss:$2 sm:$0xf]
    %s593 = scalar_lea.vmem %s546, 33 [#allocation2]
    %v594 = vld [vmem:[%s593] ss:$2 sm:$0xf]
    %s595 = scalar_lea.vmem %s546, 65 [#allocation2]
    %v596 = vld [vmem:[%s595] ss:$2 sm:$0xf]
    %s597 = scalar_lea.vmem %s546, 97 [#allocation2]
    %v598 = vld [vmem:[%s597] ss:$2 sm:$0xf]
    %s599 = scalar_lea.vmem %s546, 161 [#allocation2]
    %v600 = vld [vmem:[%s599] ss:$2 sm:$0xf]
    %s601 = scalar_lea.vmem %s546, 193 [#allocation2]
    %v602 = vld [vmem:[%s601] ss:$2 sm:$0xf]
    %s603 = scalar_lea.vmem %s546, 225 [#allocation2]
    %v604 = vld [vmem:[%s603] ss:$2 sm:$0xf]
    %s605 = scalar_lea.vmem %s546, 257 [#allocation2]
    %v606 = vld [vmem:[%s605] ss:$2 sm:$0xf]
    %v615 = vcombine.low %v592, %v594
    %v616 = vcombine.low %v596, %v598
    %v617 = vcombine.low %v600, %v602
    %v618 = vcombine.low %v604, %v606
    %619 = vrot.lane.b32.xlu0 %v615, 112
    %v620 = vpop.permute.xlu0 %619
    %621 = vrot.lane.b32.xlu0 %v616, 112
    %v622 = vpop.permute.xlu0 %621
    %623 = vrot.lane.b32.xlu0 %v617, 112
    %v624 = vpop.permute.xlu0 %623
    %625 = vrot.lane.b32.xlu0 %v618, 112
    %v626 = vpop.permute.xlu0 %625
    %vm631 = vcmask 1048448
    %632 = vst.msk [vmem:[#allocation4] sm:$0xff] %vm631, %v620
    %633 = vst.msk [vmem:[#allocation4 + $0x10] sm:$0xff] %vm631, %v622
    %634 = vst.msk [vmem:[#allocation4 + $0x20] sm:$0xff] %vm631, %v624
    %635 = vst.msk [vmem:[#allocation4 + $0x30] sm:$0xff] %vm631, %v626
    %s636 = scalar_lea.vmem %s546, 2 [#allocation2]
    %v637 = vld [vmem:[%s636] ss:$2 sm:$0xf]
    %s638 = scalar_lea.vmem %s546, 34 [#allocation2]
    %v639 = vld [vmem:[%s638] ss:$2 sm:$0xf]
    %s640 = scalar_lea.vmem %s546, 66 [#allocation2]
    %v641 = vld [vmem:[%s640] ss:$2 sm:$0xf]
    %s642 = scalar_lea.vmem %s546, 98 [#allocation2]
    %v643 = vld [vmem:[%s642] ss:$2 sm:$0xf]
    %s644 = scalar_lea.vmem %s546, 162 [#allocation2]
    %v645 = vld [vmem:[%s644] ss:$2 sm:$0xf]
    %s646 = scalar_lea.vmem %s546, 194 [#allocation2]
    %v647 = vld [vmem:[%s646] ss:$2 sm:$0xf]
    %s648 = scalar_lea.vmem %s546, 226 [#allocation2]
    %v649 = vld [vmem:[%s648] ss:$2 sm:$0xf]
    %s650 = scalar_lea.vmem %s546, 258 [#allocation2]
    %v651 = vld [vmem:[%s650] ss:$2 sm:$0xf]
    %v660 = vcombine.low %v637, %v639
    %v661 = vcombine.low %v641, %v643
    %v662 = vcombine.low %v645, %v647
    %v663 = vcombine.low %v649, %v651
    %668 = vst.msk [vmem:[#allocation4 + $0x8] sm:$0xff] %vm64, %v660
    %669 = vst.msk [vmem:[#allocation4 + $0x18] sm:$0xff] %vm64, %v661
    %670 = vst.msk [vmem:[#allocation4 + $0x28] sm:$0xff] %vm64, %v662
    %671 = vst.msk [vmem:[#allocation4 + $0x38] sm:$0xff] %vm64, %v663
    %v672 = vld [vmem:[#allocation4] sm:$0xff]
    %v673 = vld [vmem:[#allocation4 + $0x8] sm:$0xff]
    %v674 = vld [vmem:[#allocation4 + $0x10] sm:$0xff]
    %v675 = vld [vmem:[#allocation4 + $0x18] sm:$0xff]
    %v676 = vld [vmem:[#allocation4 + $0x20] sm:$0xff]
    %v677 = vld [vmem:[#allocation4 + $0x28] sm:$0xff]
    %v678 = vld [vmem:[#allocation4 + $0x30] sm:$0xff]
    %v679 = vld [vmem:[#allocation4 + $0x38] sm:$0xff]
    %v680 = vld [vmem:[%s3] sm:$0xff]
    %v681 = vld [vmem:[%s3 + $0x8] sm:$0xff]
    %v682 = vld [vmem:[%s3 + $0x10] sm:$0xff]
    %v683 = vld [vmem:[%s3 + $0x18] sm:$0xff]
    %v684 = vld [vmem:[%s3 + $0x20] sm:$0xff]
    %v685 = vld [vmem:[%s3 + $0x28] sm:$0xff]
    %v686 = vld [vmem:[%s3 + $0x30] sm:$0xff]
    %v687 = vld [vmem:[%s3 + $0x38] sm:$0xff]
    %v688 = vld [vmem:[%s3 + $0x40] sm:$0xff]
    %v689 = vld [vmem:[%s3 + $0x48] sm:$0xff]
    %v690 = vld [vmem:[%s3 + $0x50] sm:$0xff]
    %v691 = vld [vmem:[%s3 + $0x58] sm:$0xff]
    %v692 = vld [vmem:[%s3 + $0x60] sm:$0xff]
    %v693 = vld [vmem:[%s3 + $0x68] sm:$0xff]
    %v694 = vld [vmem:[%s3 + $0x70] sm:$0xff]
    %v695 = vld [vmem:[%s3 + $0x78] sm:$0xff]
    %v696 = vld [vmem:[%s3 + $0x80] sm:$0xff]
    %v697 = vld [vmem:[%s3 + $0x88] sm:$0xff]
    %v699 = vsel %vm64, %v673, 0
    %v702 = vsel %vm64, %v675, 0
    %v705 = vsel %vm64, %v677, 0
    %v708 = vsel %vm64, %v679, 0
    %710 = vmatprep.subr.mxu0 0.0
    %711 = vmatpush1.msra.mxu0 %v695
    %712 = vmatprep.subr.mxu0 0.0
    %713 = vmatpush1.msra.mxu0 %v694
    %714 = vmatprep.subr.mxu0 0.0
    %715 = vmatpush1.msra.mxu0 %v693
    %716 = vmatprep.subr.mxu0 0.0
    %717 = vmatpush1.msra.mxu0 %v692
    %718 = vmatprep.subr.mxu0 0.0
    %719 = vmatpush1.msra.mxu0 %v691
    %720 = vmatprep.subr.mxu0 0.0
    %721 = vmatpush1.msra.mxu0 %v690
    %722 = vmatprep.subr.mxu0 0.0
    %723 = vmatpush1.msra.mxu0 %v689
    %724 = vmatprep.subr.mxu0 0.0
    %725 = vmatpush1.msra.mxu0 %v688
    %726 = vmatprep.subr.mxu0 0.0
    %727 = vmatpush1.msra.mxu0 %v687
    %728 = vmatprep.subr.mxu0 0.0
    %729 = vmatpush1.msra.mxu0 %v686
    %730 = vmatprep.subr.mxu0 0.0
    %731 = vmatpush1.msra.mxu0 %v685
    %732 = vmatprep.subr.mxu0 0.0
    %733 = vmatpush1.msra.mxu0 %v684
    %734 = vmatprep.subr.mxu0 0.0
    %735 = vmatpush1.msra.mxu0 %v683
    %736 = vmatprep.subr.mxu0 0.0
    %737 = vmatpush1.msra.mxu0 %v682
    %738 = vmatprep.subr.mxu0 0.0
    %739 = vmatpush1.msra.mxu0 %v681
    %740 = vmatprep.subr.mxu0 0.0
    %741 = vmatpush1.msra.mxu0 %v680
    %742 = vmatprep.subr.mxu0 0.0
    %743 = vmatpush2.msra.mxu0 0.0
    %744 = vmatprep.subr.mxu0 0.0
    %745 = vmatpush2.msra.mxu0 0.0
    %746 = vmatprep.subr.mxu0 0.0
    %747 = vmatpush2.msra.mxu0 0.0
    %748 = vmatprep.subr.mxu0 0.0
    %749 = vmatpush2.msra.mxu0 0.0
    %750 = vmatprep.subr.mxu0 0.0
    %751 = vmatpush2.msra.mxu0 0.0
    %752 = vmatprep.subr.mxu0 0.0
    %753 = vmatpush2.msra.mxu0 0.0
    %754 = vmatprep.subr.mxu0 0.0
    %755 = vmatpush2.msra.mxu0 0.0
    %756 = vmatprep.subr.mxu0 0.0
    %757 = vmatpush2.msra.mxu0 0.0
    %758 = vmatprep.subr.mxu0 0.0
    %759 = vmatpush2.msra.mxu0 0.0
    %760 = vmatprep.subr.mxu0 0.0
    %761 = vmatpush2.msra.mxu0 0.0
    %762 = vmatprep.subr.mxu0 0.0
    %763 = vmatpush2.msra.mxu0 0.0
    %764 = vmatprep.subr.mxu0 0.0
    %765 = vmatpush2.msra.mxu0 0.0
    %766 = vmatprep.subr.mxu0 0.0
    %767 = vmatpush2.msra.mxu0 0.0
    %768 = vmatprep.subr.mxu0 0.0
    %769 = vmatpush2.msra.mxu0 0.0
    %770 = vmatprep.subr.mxu0 0.0
    %771 = vmatpush2.msra.mxu0 %v697
    %772 = vmatprep.subr.mxu0 0.0
    %773 = vmatpush2.msra.mxu0 %v696
    %774 = vmatprep.mubr.f32.mxu0 %v699
    %775 = vmatmul.mubr.f32.gmra.mxu0 %v672
    %v776 = vpop.f32.mrf.mxu0
    %v777 = vadd.f32 0.0, %v776
    %v778 = vpop.f32.mrf.mxu0
    %779 = vmatprep.mubr.f32.mxu0 %v702
    %780 = vmatmul.mubr.f32.gmra.mxu0 %v674
    %v781 = vpop.f32.mrf.mxu0
    %v782 = vadd.f32 0.0, %v781
    %v783 = vpop.f32.mrf.mxu0
    %784 = vmatprep.mubr.f32.mxu0 %v705
    %785 = vmatmul.mubr.f32.gmra.mxu0 %v676
    %v786 = vpop.f32.mrf.mxu0
    %v787 = vadd.f32 0.0, %v786
    %v788 = vpop.f32.mrf.mxu0
    %789 = vmatprep.mubr.f32.mxu0 %v708
    %790 = vmatmul.mubr.f32.gmra.mxu0 %v678
    %v791 = vpop.f32.mrf.mxu0
    %v792 = vadd.f32 0.0, %v791
    %v793 = vpop.f32.mrf.mxu0
    %794 = vdwg.mxu0
    %vm795 = vcmask 261120
    %v796 = vsel %vm795, %v777, 0.0
    %v797 = vsel %vm795, %v782, 0.0
    %v798 = vadd.f32 %v796, %v797
    %v799 = vsel %vm795, %v787, 0.0
    %v800 = vadd.f32 %v798, %v799
    %v801 = vsel %vm795, %v792, 0.0
    %v802 = vadd.f32 %v800, %v801
    %v803 = vrot.slane %v802, 4
    %v804 = vadd.f32 %v802, %v803
    %v805 = vrot.slane %v804, 2
    %v806 = vadd.f32 %v804, %v805
    %v807 = vrot.slane %v806, 1
    %v808 = vadd.f32 %v806, %v807
    %v809 = vmul.f32 %v777, %v777
    %v810 = vmul.f32 %v782, %v782
    %v811 = vmul.f32 %v787, %v787
    %v812 = vmul.f32 %v792, %v792
    %v813 = vsel %vm795, %v809, 0.0
    %v814 = vsel %vm795, %v810, 0.0
    %v815 = vadd.f32 %v813, %v814
    %v816 = vsel %vm795, %v811, 0.0
    %v817 = vadd.f32 %v815, %v816
    %v818 = vsel %vm795, %v812, 0.0
    %v819 = vadd.f32 %v817, %v818
    %v820 = vrot.slane %v819, 4
    %v821 = vadd.f32 %v819, %v820
    %v822 = vrot.slane %v821, 2
    %v823 = vadd.f32 %v821, %v822
    %v824 = vrot.slane %v823, 1
    %v825 = vadd.f32 %v823, %v824
    %v826 = vmul.f32 %v808, 0.03125
    %v827 = vmul.f32 %v825, 0.03125
    %v828 = vmul.f32 %v826, %v826
    %v829 = vsub.f32 %v827, %v828
    %v830 = vmax.f32 %v829, 0.0
    %v831 = vld [vmem:[%s4] sm:$0x1]
    %v832 = vadd.f32 %v830, 1e-05
    %v833 = vrsqrt.pop %v832
    %v834 = vmul.f32 %v831, %v833
    %v835 = vld [vmem:[%s5] sm:$0x1]
    %v836 = vmul.f32 %v826, %v834
    %v837 = vsub.f32 %v835, %v836
    %v839 = vlaneseq
    %v840 = vshrl.u32 %v839, 7
    %v841 = vsub.s32 0, %v840
    %v842 = vrot.slane %v834, %v841
    %v844 = vmul.f32 %v777, %v842
    %v845 = vmul.f32 %v782, %v842
    %v846 = vmul.f32 %v787, %v842
    %v847 = vmul.f32 %v792, %v842
    %v849 = vlaneseq
    %v850 = vshrl.u32 %v849, 7
    %v851 = vsub.s32 0, %v850
    %v852 = vrot.slane %v837, %v851
    %v854 = vadd.f32 %v844, %v852
    %v855 = vadd.f32 %v845, %v852
    %v856 = vadd.f32 %v846, %v852
    %v857 = vadd.f32 %v847, %v852
    %v858 = vmax.f32 %v854, 0.0
    %v859 = vmax.f32 %v855, 0.0
    %v860 = vmax.f32 %v856, 0.0
    %v861 = vmax.f32 %v857, 0.0
    %v866 = vcombine.high %v858, %v858
    %v867 = vcombine.high %v859, %v859
    %v868 = vcombine.high %v860, %v860
    %v869 = vcombine.high %v861, %v861
    %vm874 = vcmask 259072
    %875 = vst.msk [vmem:[#allocation3] sm:$0x3f] %vm874, 0.0
    %876 = vst.msk [vmem:[#allocation3 + $0x30] sm:$0x3f] %vm874, 0.0
    %s877 = scalar_lea.vmem [#allocation3], 40
    %878 = vst.msk [vmem:[%s877] sm:$0x3f] %vm874, 0.0
    %879 = vst.msk [vmem:[%s877 + $0x30] sm:$0x3f] %vm874, 0.0
    %s880 = scalar_lea.vmem [#allocation3], 8
    %vm881 = vcmask 253952
    %882 = vst.msk [vmem:[%s880] sm:$0x1] %vm881, 0.0
    %883 = vst.msk [vmem:[%s880 + $0x8] sm:$0x1] %vm881, 0.0
    %884 = vst.msk [vmem:[%s880 + $0x10] sm:$0x1] %vm881, 0.0
    %885 = vst.msk [vmem:[%s880 + $0x18] sm:$0x1] %vm881, 0.0
    %886 = vst.msk [vmem:[%s880 + $0x30] sm:$0x1] %vm881, 0.0
    %887 = vst.msk [vmem:[%s880 + $0x38] sm:$0x1] %vm881, 0.0
    %888 = vst.msk [vmem:[%s880 + $0x40] sm:$0x1] %vm881, 0.0
    %889 = vst.msk [vmem:[%s880 + $0x48] sm:$0x1] %vm881, 0.0
    %890 = vst.msk [vmem:[%s880 + $0x5] sm:$0x1] %vm881, 0.0
    %891 = vst.msk [vmem:[%s880 + $0xd] sm:$0x1] %vm881, 0.0
    %892 = vst.msk [vmem:[%s880 + $0x15] sm:$0x1] %vm881, 0.0
    %893 = vst.msk [vmem:[%s880 + $0x1d] sm:$0x1] %vm881, 0.0
    %894 = vst.msk [vmem:[%s880 + $0x35] sm:$0x1] %vm881, 0.0
    %895 = vst.msk [vmem:[%s880 + $0x3d] sm:$0x1] %vm881, 0.0
    %896 = vst.msk [vmem:[%s880 + $0x45] sm:$0x1] %vm881, 0.0
    %897 = vst.msk [vmem:[%s880 + $0x4d] sm:$0x1] %vm881, 0.0
    %vm898 = vcmask 257024
    %899 = vst.msk [vmem:[%s880 + $0x1] sm:$0xf] %vm898, %v858
    %900 = vst.msk [vmem:[%s880 + $0x9] sm:$0xf] %vm898, %v866
    %901 = vst.msk [vmem:[%s880 + $0x11] sm:$0xf] %vm898, %v859
    %902 = vst.msk [vmem:[%s880 + $0x19] sm:$0xf] %vm898, %v867
    %903 = vst.msk [vmem:[%s880 + $0x31] sm:$0xf] %vm898, %v860
    %904 = vst.msk [vmem:[%s880 + $0x39] sm:$0xf] %vm898, %v868
    %905 = vst.msk [vmem:[%s880 + $0x41] sm:$0xf] %vm898, %v861
    %906 = vst.msk [vmem:[%s880 + $0x49] sm:$0xf] %vm898, %v869
    %v907 = vld [vmem:[#allocation3] sm:$0xf]
    %v908 = vld [vmem:[#allocation3 + $0x8] sm:$0xf]
    %v909 = vld [vmem:[#allocation3 + $0x10] sm:$0xf]
    %v910 = vld [vmem:[#allocation3 + $0x18] sm:$0xf]
    %v911 = vld [vmem:[#allocation3 + $0x30] sm:$0xf]
    %v912 = vld [vmem:[#allocation3 + $0x38] sm:$0xf]
    %v913 = vld [vmem:[#allocation3 + $0x40] sm:$0xf]
    %v914 = vld [vmem:[#allocation3 + $0x48] sm:$0xf]
    %v923 = vcombine.low %v907, %v908
    %v924 = vcombine.low %v909, %v910
    %v925 = vcombine.low %v911, %v912
    %v926 = vcombine.low %v913, %v914
    %931 = vst.msk [vmem:[#allocation5] sm:$0xff] %vm795, %v923
    %932 = vst.msk [vmem:[#allocation5 + $0x18] sm:$0xff] %vm795, %v924
    %933 = vst.msk [vmem:[#allocation5 + $0x30] sm:$0xff] %vm795, %v925
    %934 = vst.msk [vmem:[#allocation5 + $0x48] sm:$0xff] %vm795, %v926
    %v935 = vld [vmem:[#allocation3 + $0x1] sm:$0xf]
    %v936 = vld [vmem:[#allocation3 + $0x9] sm:$0xf]
    %v937 = vld [vmem:[#allocation3 + $0x11] sm:$0xf]
    %v938 = vld [vmem:[#allocation3 + $0x19] sm:$0xf]
    %v939 = vld [vmem:[#allocation3 + $0x31] sm:$0xf]
    %v940 = vld [vmem:[#allocation3 + $0x39] sm:$0xf]
    %v941 = vld [vmem:[#allocation3 + $0x41] sm:$0xf]
    %v942 = vld [vmem:[#allocation3 + $0x49] sm:$0xf]
    %v951 = vcombine.low %v935, %v936
    %v952 = vcombine.low %v937, %v938
    %v953 = vcombine.low %v939, %v940
    %v954 = vcombine.low %v941, %v942
    %955 = vrot.lane.b32.xlu0 %v951, 32
    %v956 = vpop.permute.xlu0 %955
    %957 = vrot.lane.b32.xlu0 %v952, 32
    %v958 = vpop.permute.xlu0 %957
    %959 = vrot.lane.b32.xlu0 %v953, 32
    %v960 = vpop.permute.xlu0 %959
    %961 = vrot.lane.b32.xlu0 %v954, 32
    %v962 = vpop.permute.xlu0 %961
    %vm967 = vcmask 523520
    %968 = vst.msk [vmem:[#allocation5] sm:$0xff] %vm967, %v956
    %969 = vst.msk [vmem:[#allocation5 + $0x18] sm:$0xff] %vm967, %v958
    %970 = vst.msk [vmem:[#allocation5 + $0x30] sm:$0xff] %vm967, %v960
    %971 = vst.msk [vmem:[#allocation5 + $0x48] sm:$0xff] %vm967, %v962
    %v972 = vld [vmem:[#allocation3 + $0x2] sm:$0xf]
    %v973 = vld [vmem:[#allocation3 + $0xa] sm:$0xf]
    %v974 = vld [vmem:[#allocation3 + $0x12] sm:$0xf]
    %v975 = vld [vmem:[#allocation3 + $0x1a] sm:$0xf]
    %v976 = vld [vmem:[#allocation3 + $0x32] sm:$0xf]
    %v977 = vld [vmem:[#allocation3 + $0x3a] sm:$0xf]
    %v978 = vld [vmem:[#allocation3 + $0x42] sm:$0xf]
    %v979 = vld [vmem:[#allocation3 + $0x4a] sm:$0xf]
    %v988 = vcombine.low %v972, %v973
    %v989 = vcombine.low %v974, %v975
    %v990 = vcombine.low %v976, %v977
    %v991 = vcombine.low %v978, %v979
    %992 = vrot.lane.b32.xlu0 %v988, 64
    %v993 = vpop.permute.xlu0 %992
    %994 = vrot.lane.b32.xlu0 %v989, 64
    %v995 = vpop.permute.xlu0 %994
    %996 = vrot.lane.b32.xlu0 %v990, 64
    %v997 = vpop.permute.xlu0 %996
    %998 = vrot.lane.b32.xlu0 %v991, 64
    %v999 = vpop.permute.xlu0 %998
    %vm1004 = vcmask 785920
    %1005 = vst.msk [vmem:[#allocation5] sm:$0xff] %vm1004, %v993
    %1006 = vst.msk [vmem:[#allocation5 + $0x18] sm:$0xff] %vm1004, %v995
    %1007 = vst.msk [vmem:[#allocation5 + $0x30] sm:$0xff] %vm1004, %v997
    %1008 = vst.msk [vmem:[#allocation5 + $0x48] sm:$0xff] %vm1004, %v999
    %v1009 = vld [vmem:[%s880] sm:$0xf]
    %v1010 = vld [vmem:[%s880 + $0x8] sm:$0xf]
    %v1011 = vld [vmem:[%s880 + $0x10] sm:$0xf]
    %v1012 = vld [vmem:[%s880 + $0x18] sm:$0xf]
    %v1013 = vld [vmem:[%s880 + $0x30] sm:$0xf]
    %v1014 = vld [vmem:[%s880 + $0x38] sm:$0xf]
    %v1015 = vld [vmem:[%s880 + $0x40] sm:$0xf]
    %v1016 = vld [vmem:[%s880 + $0x48] sm:$0xf]
    %v1025 = vcombine.low %v1009, %v1010
    %v1026 = vcombine.low %v1011, %v1012
    %v1027 = vcombine.low %v1013, %v1014
    %v1028 = vcombine.low %v1015, %v1016
    %1029 = vrot.lane.b32.xlu0 %v1025, 96
    %v1030 = vpop.permute.xlu0 %1029
    %1031 = vrot.lane.b32.xlu0 %v1026, 96
    %v1032 = vpop.permute.xlu0 %1031
    %1033 = vrot.lane.b32.xlu0 %v1027, 96
    %v1034 = vpop.permute.xlu0 %1033
    %1035 = vrot.lane.b32.xlu0 %v1028, 96
    %v1036 = vpop.permute.xlu0 %1035
    %vm1041 = vcmask 1048320
    %1042 = vst.msk [vmem:[#allocation5] sm:$0xff] %vm1041, %v1030
    %1043 = vst.msk [vmem:[#allocation5 + $0x18] sm:$0xff] %vm1041, %v1032
    %1044 = vst.msk [vmem:[#allocation5 + $0x30] sm:$0xff] %vm1041, %v1034
    %1045 = vst.msk [vmem:[#allocation5 + $0x48] sm:$0xff] %vm1041, %v1036
    %v1046 = vld [vmem:[%s880 + $0x1] sm:$0xf]
    %v1047 = vld [vmem:[%s880 + $0x9] sm:$0xf]
    %v1048 = vld [vmem:[%s880 + $0x11] sm:$0xf]
    %v1049 = vld [vmem:[%s880 + $0x19] sm:$0xf]
    %v1050 = vld [vmem:[%s880 + $0x31] sm:$0xf]
    %v1051 = vld [vmem:[%s880 + $0x39] sm:$0xf]
    %v1052 = vld [vmem:[%s880 + $0x41] sm:$0xf]
    %v1053 = vld [vmem:[%s880 + $0x49] sm:$0xf]
    %v1062 = vcombine.low %v1046, %v1047
    %v1063 = vcombine.low %v1048, %v1049
    %v1064 = vcombine.low %v1050, %v1051
    %v1065 = vcombine.low %v1052, %v1053
    %1070 = vst.msk [vmem:[#allocation5 + $0x8] sm:$0xff] %vm795, %v1062
    %1071 = vst.msk [vmem:[#allocation5 + $0x20] sm:$0xff] %vm795, %v1063
    %1072 = vst.msk [vmem:[#allocation5 + $0x38] sm:$0xff] %vm795, %v1064
    %1073 = vst.msk [vmem:[#allocation5 + $0x50] sm:$0xff] %vm795, %v1065
    %v1074 = vld [vmem:[%s880 + $0x2] sm:$0xf]
    %v1075 = vld [vmem:[%s880 + $0xa] sm:$0xf]
    %v1076 = vld [vmem:[%s880 + $0x12] sm:$0xf]
    %v1077 = vld [vmem:[%s880 + $0x1a] sm:$0xf]
    %v1078 = vld [vmem:[%s880 + $0x32] sm:$0xf]
    %v1079 = vld [vmem:[%s880 + $0x3a] sm:$0xf]
    %v1080 = vld [vmem:[%s880 + $0x42] sm:$0xf]
    %v1081 = vld [vmem:[%s880 + $0x4a] sm:$0xf]
    %v1090 = vcombine.low %v1074, %v1075
    %v1091 = vcombine.low %v1076, %v1077
    %v1092 = vcombine.low %v1078, %v1079
    %v1093 = vcombine.low %v1080, %v1081
    %1094 = vrot.lane.b32.xlu0 %v1090, 32
    %v1095 = vpop.permute.xlu0 %1094
    %1096 = vrot.lane.b32.xlu0 %v1091, 32
    %v1097 = vpop.permute.xlu0 %1096
    %1098 = vrot.lane.b32.xlu0 %v1092, 32
    %v1099 = vpop.permute.xlu0 %1098
    %1100 = vrot.lane.b32.xlu0 %v1093, 32
    %v1101 = vpop.permute.xlu0 %1100
    %1106 = vst.msk [vmem:[#allocation5 + $0x8] sm:$0xff] %vm967, %v1095
    %1107 = vst.msk [vmem:[#allocation5 + $0x20] sm:$0xff] %vm967, %v1097
    %1108 = vst.msk [vmem:[#allocation5 + $0x38] sm:$0xff] %vm967, %v1099
    %1109 = vst.msk [vmem:[#allocation5 + $0x50] sm:$0xff] %vm967, %v1101
    %s1110 = scalar_lea.vmem [#allocation3], 16
    %v1111 = vld [vmem:[%s1110] sm:$0xf]
    %v1112 = vld [vmem:[%s1110 + $0x8] sm:$0xf]
    %v1113 = vld [vmem:[%s1110 + $0x10] sm:$0xf]
    %v1114 = vld [vmem:[%s1110 + $0x18] sm:$0xf]
    %v1115 = vld [vmem:[%s1110 + $0x30] sm:$0xf]
    %v1116 = vld [vmem:[%s1110 + $0x38] sm:$0xf]
    %v1117 = vld [vmem:[%s1110 + $0x40] sm:$0xf]
    %v1118 = vld [vmem:[%s1110 + $0x48] sm:$0xf]
    %v1127 = vcombine.low %v1111, %v1112
    %v1128 = vcombine.low %v1113, %v1114
    %v1129 = vcombine.low %v1115, %v1116
    %v1130 = vcombine.low %v1117, %v1118
    %1131 = vrot.lane.b32.xlu0 %v1127, 64
    %v1132 = vpop.permute.xlu0 %1131
    %1133 = vrot.lane.b32.xlu0 %v1128, 64
    %v1134 = vpop.permute.xlu0 %1133
    %1135 = vrot.lane.b32.xlu0 %v1129, 64
    %v1136 = vpop.permute.xlu0 %1135
    %1137 = vrot.lane.b32.xlu0 %v1130, 64
    %v1138 = vpop.permute.xlu0 %1137
    %1143 = vst.msk [vmem:[#allocation5 + $0x8] sm:$0xff] %vm1004, %v1132
    %1144 = vst.msk [vmem:[#allocation5 + $0x20] sm:$0xff] %vm1004, %v1134
    %1145 = vst.msk [vmem:[#allocation5 + $0x38] sm:$0xff] %vm1004, %v1136
    %1146 = vst.msk [vmem:[#allocation5 + $0x50] sm:$0xff] %vm1004, %v1138
    %v1147 = vld [vmem:[%s1110 + $0x1] sm:$0xf]
    %v1148 = vld [vmem:[%s1110 + $0x9] sm:$0xf]
    %v1149 = vld [vmem:[%s1110 + $0x11] sm:$0xf]
    %v1150 = vld [vmem:[%s1110 + $0x19] sm:$0xf]
    %v1151 = vld [vmem:[%s1110 + $0x31] sm:$0xf]
    %v1152 = vld [vmem:[%s1110 + $0x39] sm:$0xf]
    %v1153 = vld [vmem:[%s1110 + $0x41] sm:$0xf]
    %v1154 = vld [vmem:[%s1110 + $0x49] sm:$0xf]
    %v1163 = vcombine.low %v1147, %v1148
    %v1164 = vcombine.low %v1149, %v1150
    %v1165 = vcombine.low %v1151, %v1152
    %v1166 = vcombine.low %v1153, %v1154
    %1167 = vrot.lane.b32.xlu0 %v1163, 96
    %v1168 = vpop.permute.xlu0 %1167
    %1169 = vrot.lane.b32.xlu0 %v1164, 96
    %v1170 = vpop.permute.xlu0 %1169
    %1171 = vrot.lane.b32.xlu0 %v1165, 96
    %v1172 = vpop.permute.xlu0 %1171
    %1173 = vrot.lane.b32.xlu0 %v1166, 96
    %v1174 = vpop.permute.xlu0 %1173
    %1179 = vst.msk [vmem:[#allocation5 + $0x8] sm:$0xff] %vm1041, %v1168
    %1180 = vst.msk [vmem:[#allocation5 + $0x20] sm:$0xff] %vm1041, %v1170
    %1181 = vst.msk [vmem:[#allocation5 + $0x38] sm:$0xff] %vm1041, %v1172
    %1182 = vst.msk [vmem:[#allocation5 + $0x50] sm:$0xff] %vm1041, %v1174
    %v1183 = vld [vmem:[%s1110 + $0x2] sm:$0xf]
    %v1184 = vld [vmem:[%s1110 + $0xa] sm:$0xf]
    %v1185 = vld [vmem:[%s1110 + $0x12] sm:$0xf]
    %v1186 = vld [vmem:[%s1110 + $0x1a] sm:$0xf]
    %v1187 = vld [vmem:[%s1110 + $0x32] sm:$0xf]
    %v1188 = vld [vmem:[%s1110 + $0x3a] sm:$0xf]
    %v1189 = vld [vmem:[%s1110 + $0x42] sm:$0xf]
    %v1190 = vld [vmem:[%s1110 + $0x4a] sm:$0xf]
    %v1199 = vcombine.low %v1183, %v1184
    %v1200 = vcombine.low %v1185, %v1186
    %v1201 = vcombine.low %v1187, %v1188
    %v1202 = vcombine.low %v1189, %v1190
    %1207 = vst.msk [vmem:[#allocation5 + $0x10] sm:$0xff] %vm795, %v1199
    %1208 = vst.msk [vmem:[#allocation5 + $0x28] sm:$0xff] %vm795, %v1200
    %1209 = vst.msk [vmem:[#allocation5 + $0x40] sm:$0xff] %vm795, %v1201
    %1210 = vst.msk [vmem:[#allocation5 + $0x58] sm:$0xff] %vm795, %v1202
    %v1211 = vld [vmem:[#allocation5] sm:$0xff]
    %v1212 = vld [vmem:[#allocation5 + $0x8] sm:$0xff]
    %v1213 = vld [vmem:[#allocation5 + $0x10] sm:$0xff]
    %v1214 = vld [vmem:[#allocation5 + $0x18] sm:$0xff]
    %v1215 = vld [vmem:[#allocation5 + $0x20] sm:$0xff]
    %v1216 = vld [vmem:[#allocation5 + $0x28] sm:$0xff]
    %v1217 = vld [vmem:[#allocation5 + $0x30] sm:$0xff]
    %v1218 = vld [vmem:[#allocation5 + $0x38] sm:$0xff]
    %v1219 = vld [vmem:[#allocation5 + $0x40] sm:$0xff]
    %v1220 = vld [vmem:[#allocation5 + $0x48] sm:$0xff]
    %v1221 = vld [vmem:[#allocation5 + $0x50] sm:$0xff]
    %v1222 = vld [vmem:[#allocation5 + $0x58] sm:$0xff]
    %v1223 = vld [vmem:[%s6] sm:$0xff]
    %v1224 = vld [vmem:[%s6 + $0x8] sm:$0xff]
    %v1225 = vld [vmem:[%s6 + $0x10] sm:$0xff]
    %v1226 = vld [vmem:[%s6 + $0x18] sm:$0xff]
    %v1227 = vld [vmem:[%s6 + $0x20] sm:$0xff]
    %v1228 = vld [vmem:[%s6 + $0x28] sm:$0xff]
    %v1229 = vld [vmem:[%s6 + $0x30] sm:$0xff]
    %v1230 = vld [vmem:[%s6 + $0x38] sm:$0xff]
    %v1231 = vld [vmem:[%s6 + $0x40] sm:$0xff]
    %v1232 = vld [vmem:[%s6 + $0x48] sm:$0xff]
    %v1233 = vld [vmem:[%s6 + $0x50] sm:$0xff]
    %v1234 = vld [vmem:[%s6 + $0x58] sm:$0xff]
    %v1235 = vld [vmem:[%s6 + $0x60] sm:$0xff]
    %v1236 = vld [vmem:[%s6 + $0x68] sm:$0xff]
    %v1237 = vld [vmem:[%s6 + $0x70] sm:$0xff]
    %v1238 = vld [vmem:[%s6 + $0x78] sm:$0xff]
    %v1239 = vld [vmem:[%s6 + $0x80] sm:$0xff]
    %v1240 = vld [vmem:[%s6 + $0x88] sm:$0xff]
    %v1241 = vld [vmem:[%s6 + $0x90] sm:$0xff]
    %v1242 = vld [vmem:[%s6 + $0x98] sm:$0xff]
    %v1243 = vld [vmem:[%s6 + $0xa0] sm:$0xff]
    %v1244 = vld [vmem:[%s6 + $0xa8] sm:$0xff]
    %v1245 = vld [vmem:[%s6 + $0xb0] sm:$0xff]
    %v1246 = vld [vmem:[%s6 + $0xb8] sm:$0xff]
    %v1247 = vld [vmem:[%s6 + $0xc0] sm:$0xff]
    %v1248 = vld [vmem:[%s6 + $0xc8] sm:$0xff]
    %v1249 = vld [vmem:[%s6 + $0xd0] sm:$0xff]
    %v1250 = vld [vmem:[%s6 + $0xd8] sm:$0xff]
    %v1251 = vld [vmem:[%s6 + $0xe0] sm:$0xff]
    %v1252 = vld [vmem:[%s6 + $0xe8] sm:$0xff]
    %v1253 = vld [vmem:[%s6 + $0xf0] sm:$0xff]
    %v1254 = vld [vmem:[%s6 + $0xf8] sm:$0xff]
    %v1255 = vld [vmem:[%s6 + $0x100] sm:$0xff]
    %v1256 = vld [vmem:[%s6 + $0x108] sm:$0xff]
    %v1257 = vld [vmem:[%s6 + $0x110] sm:$0xff]
    %v1258 = vld [vmem:[%s6 + $0x118] sm:$0xff]
    %v1260 = vsel %vm795, %v1213, 0
    %v1263 = vsel %vm795, %v1216, 0
    %v1266 = vsel %vm795, %v1219, 0
    %v1269 = vsel %vm795, %v1222, 0
    %1271 = vmatprep.subr.mxu0 0.0
    %1272 = vmatpush1.msra.mxu0 %v1238
    %1273 = vmatprep.subr.mxu0 0.0
    %1274 = vmatpush1.msra.mxu0 %v1237
    %1275 = vmatprep.subr.mxu0 0.0
    %1276 = vmatpush1.msra.mxu0 %v1236
    %1277 = vmatprep.subr.mxu0 0.0
    %1278 = vmatpush1.msra.mxu0 %v1235
    %1279 = vmatprep.subr.mxu0 0.0
    %1280 = vmatpush1.msra.mxu0 %v1234
    %1281 = vmatprep.subr.mxu0 0.0
    %1282 = vmatpush1.msra.mxu0 %v1233
    %1283 = vmatprep.subr.mxu0 0.0
    %1284 = vmatpush1.msra.mxu0 %v1232
    %1285 = vmatprep.subr.mxu0 0.0
    %1286 = vmatpush1.msra.mxu0 %v1231
    %1287 = vmatprep.subr.mxu0 0.0
    %1288 = vmatpush1.msra.mxu0 %v1230
    %1289 = vmatprep.subr.mxu0 0.0
    %1290 = vmatpush1.msra.mxu0 %v1229
    %1291 = vmatprep.subr.mxu0 0.0
    %1292 = vmatpush1.msra.mxu0 %v1228
    %1293 = vmatprep.subr.mxu0 0.0
    %1294 = vmatpush1.msra.mxu0 %v1227
    %1295 = vmatprep.subr.mxu0 0.0
    %1296 = vmatpush1.msra.mxu0 %v1226
    %1297 = vmatprep.subr.mxu0 0.0
    %1298 = vmatpush1.msra.mxu0 %v1225
    %1299 = vmatprep.subr.mxu0 0.0
    %1300 = vmatpush1.msra.mxu0 %v1224
    %1301 = vmatprep.subr.mxu0 0.0
    %1302 = vmatpush1.msra.mxu0 %v1223
    %1303 = vmatprep.subr.mxu0 0.0
    %1304 = vmatpush2.msra.mxu0 %v1254
    %1305 = vmatprep.subr.mxu0 0.0
    %1306 = vmatpush2.msra.mxu0 %v1253
    %1307 = vmatprep.subr.mxu0 0.0
    %1308 = vmatpush2.msra.mxu0 %v1252
    %1309 = vmatprep.subr.mxu0 0.0
    %1310 = vmatpush2.msra.mxu0 %v1251
    %1311 = vmatprep.subr.mxu0 0.0
    %1312 = vmatpush2.msra.mxu0 %v1250
    %1313 = vmatprep.subr.mxu0 0.0
    %1314 = vmatpush2.msra.mxu0 %v1249
    %1315 = vmatprep.subr.mxu0 0.0
    %1316 = vmatpush2.msra.mxu0 %v1248
    %1317 = vmatprep.subr.mxu0 0.0
    %1318 = vmatpush2.msra.mxu0 %v1247
    %1319 = vmatprep.subr.mxu0 0.0
    %1320 = vmatpush2.msra.mxu0 %v1246
    %1321 = vmatprep.subr.mxu0 0.0
    %1322 = vmatpush2.msra.mxu0 %v1245
    %1323 = vmatprep.subr.mxu0 0.0
    %1324 = vmatpush2.msra.mxu0 %v1244
    %1325 = vmatprep.subr.mxu0 0.0
    %1326 = vmatpush2.msra.mxu0 %v1243
    %1327 = vmatprep.subr.mxu0 0.0
    %1328 = vmatpush2.msra.mxu0 %v1242
    %1329 = vmatprep.subr.mxu0 0.0
    %1330 = vmatpush2.msra.mxu0 %v1241
    %1331 = vmatprep.subr.mxu0 0.0
    %1332 = vmatpush2.msra.mxu0 %v1240
    %1333 = vmatprep.subr.mxu0 0.0
    %1334 = vmatpush2.msra.mxu0 %v1239
    %1335 = vmatprep.mubr.f32.mxu0 %v1212
    %1336 = vmatmul.mubr.f32.gmra.mxu0 %v1211
    %v1337 = vpop.f32.mrf.mxu0
    %v1338 = vadd.f32 0.0, %v1337
    %v1339 = vpop.f32.mrf.mxu0
    %1340 = vmatprep.mubr.f32.mxu0 %v1215
    %1341 = vmatmul.mubr.f32.gmra.mxu0 %v1214
    %v1342 = vpop.f32.mrf.mxu0
    %v1343 = vadd.f32 0.0, %v1342
    %v1344 = vpop.f32.mrf.mxu0
    %1345 = vmatprep.mubr.f32.mxu0 %v1218
    %1346 = vmatmul.mubr.f32.gmra.mxu0 %v1217
    %v1347 = vpop.f32.mrf.mxu0
    %v1348 = vadd.f32 0.0, %v1347
    %v1349 = vpop.f32.mrf.mxu0
    %1350 = vmatprep.mubr.f32.mxu0 %v1221
    %1351 = vmatmul.mubr.f32.gmra.mxu0 %v1220
    %v1352 = vpop.f32.mrf.mxu0
    %v1353 = vadd.f32 0.0, %v1352
    %v1354 = vpop.f32.mrf.mxu0
    %1355 = vdwg.mxu0
    %1356 = vmatprep.subr.mxu0 0.0
    %1357 = vmatpush1.msra.mxu0 0.0
    %1358 = vmatprep.subr.mxu0 0.0
    %1359 = vmatpush1.msra.mxu0 0.0
    %1360 = vmatprep.subr.mxu0 0.0
    %1361 = vmatpush1.msra.mxu0 0.0
    %1362 = vmatprep.subr.mxu0 0.0
    %1363 = vmatpush1.msra.mxu0 0.0
    %1364 = vmatprep.subr.mxu0 0.0
    %1365 = vmatpush1.msra.mxu0 0.0
    %1366 = vmatprep.subr.mxu0 0.0
    %1367 = vmatpush1.msra.mxu0 0.0
    %1368 = vmatprep.subr.mxu0 0.0
    %1369 = vmatpush1.msra.mxu0 0.0
    %1370 = vmatprep.subr.mxu0 0.0
    %1371 = vmatpush1.msra.mxu0 0.0
    %1372 = vmatprep.subr.mxu0 0.0
    %1373 = vmatpush1.msra.mxu0 0.0
    %1374 = vmatprep.subr.mxu0 0.0
    %1375 = vmatpush1.msra.mxu0 0.0
    %1376 = vmatprep.subr.mxu0 0.0
    %1377 = vmatpush1.msra.mxu0 0.0
    %1378 = vmatprep.subr.mxu0 0.0
    %1379 = vmatpush1.msra.mxu0 0.0
    %1380 = vmatprep.subr.mxu0 0.0
    %1381 = vmatpush1.msra.mxu0 %v1258
    %1382 = vmatprep.subr.mxu0 0.0
    %1383 = vmatpush1.msra.mxu0 %v1257
    %1384 = vmatprep.subr.mxu0 0.0
    %1385 = vmatpush1.msra.mxu0 %v1256
    %1386 = vmatprep.subr.mxu0 0.0
    %1387 = vmatpush1.msra.mxu0 %v1255
    %1388 = vmatprep.subr.mxu0 0.0
    %1389 = vmatpush2.msra.mxu0 0.0
    %1390 = vmatprep.subr.mxu0 0.0
    %1391 = vmatpush2.msra.mxu0 0.0
    %1392 = vmatprep.subr.mxu0 0.0
    %1393 = vmatpush2.msra.mxu0 0.0
    %1394 = vmatprep.subr.mxu0 0.0
    %1395 = vmatpush2.msra.mxu0 0.0
    %1396 = vmatprep.subr.mxu0 0.0
    %1397 = vmatpush2.msra.mxu0 0.0
    %1398 = vmatprep.subr.mxu0 0.0
    %1399 = vmatpush2.msra.mxu0 0.0
    %1400 = vmatprep.subr.mxu0 0.0
    %1401 = vmatpush2.msra.mxu0 0.0
    %1402 = vmatprep.subr.mxu0 0.0
    %1403 = vmatpush2.msra.mxu0 0.0
    %1404 = vmatprep.subr.mxu0 0.0
    %1405 = vmatpush2.msra.mxu0 0.0
    %1406 = vmatprep.subr.mxu0 0.0
    %1407 = vmatpush2.msra.mxu0 0.0
    %1408 = vmatprep.subr.mxu0 0.0
    %1409 = vmatpush2.msra.mxu0 0.0
    %1410 = vmatprep.subr.mxu0 0.0
    %1411 = vmatpush2.msra.mxu0 0.0
    %1412 = vmatprep.subr.mxu0 0.0
    %1413 = vmatpush2.msra.mxu0 0.0
    %1414 = vmatprep.subr.mxu0 0.0
    %1415 = vmatpush2.msra.mxu0 0.0
    %1416 = vmatprep.subr.mxu0 0.0
    %1417 = vmatpush2.msra.mxu0 0.0
    %1418 = vmatprep.subr.mxu0 0.0
    %1419 = vmatpush2.msra.mxu0 0.0
    %1420 = vmatprep.mubr.f32.mxu0 0.0
    %1421 = vmatmul.mubr.f32.gmra.mxu0 %v1260
    %v1422 = vpop.f32.mrf.mxu0
    %v1423 = vadd.f32 %v1338, %v1422
    %v1424 = vpop.f32.mrf.mxu0
    %1425 = vmatprep.mubr.f32.mxu0 0.0
    %1426 = vmatmul.mubr.f32.gmra.mxu0 %v1263
    %v1427 = vpop.f32.mrf.mxu0
    %v1428 = vadd.f32 %v1343, %v1427
    %v1429 = vpop.f32.mrf.mxu0
    %1430 = vmatprep.mubr.f32.mxu0 0.0
    %1431 = vmatmul.mubr.f32.gmra.mxu0 %v1266
    %v1432 = vpop.f32.mrf.mxu0
    %v1433 = vadd.f32 %v1348, %v1432
    %v1434 = vpop.f32.mrf.mxu0
    %1435 = vmatprep.mubr.f32.mxu0 0.0
    %1436 = vmatmul.mubr.f32.gmra.mxu0 %v1269
    %v1437 = vpop.f32.mrf.mxu0
    %v1438 = vadd.f32 %v1353, %v1437
    %v1439 = vpop.f32.mrf.mxu0
    %1440 = vdwg.mxu0
    %v1441 = vld [vmem:[%s0] ss:$2 sm:$0xf]
    %s1442 = scalar_lea.vmem %s0, 16
    %v1443 = vld [vmem:[%s1442] ss:$2 sm:$0xf]
    %s1444 = scalar_lea.vmem %s0, 32
    %v1445 = vld [vmem:[%s1444] ss:$2 sm:$0xf]
    %s1446 = scalar_lea.vmem %s0, 48
    %v1447 = vld [vmem:[%s1446] ss:$2 sm:$0xf]
    %s1448 = scalar_lea.vmem %s0, 64
    %v1449 = vld [vmem:[%s1448] ss:$2 sm:$0xf]
    %s1450 = scalar_lea.vmem %s0, 80
    %v1451 = vld [vmem:[%s1450] ss:$2 sm:$0xf]
    %s1452 = scalar_lea.vmem %s0, 96
    %v1453 = vld [vmem:[%s1452] ss:$2 sm:$0xf]
    %s1454 = scalar_lea.vmem %s0, 112
    %v1455 = vld [vmem:[%s1454] ss:$2 sm:$0xf]
    %v1456 = vld [vmem:[%s11] sm:$0xff]
    %v1457 = vld [vmem:[%s11 + $0x8] sm:$0xff]
    %v1466 = vcombine.low %v1441, %v1443
    %v1467 = vcombine.low %v1445, %v1447
    %v1468 = vcombine.low %v1449, %v1451
    %v1469 = vcombine.low %v1453, %v1455
    %v1470 = vsel %vm64, %v1466, 0
    %v1472 = vsel %vm64, %v1467, 0
    %v1474 = vsel %vm64, %v1468, 0
    %v1476 = vsel %vm64, %v1469, 0
    %1478 = vmatprep.subr.mxu0 0.0
    %1479 = vmatpush1.msra.mxu0 0.0
    %1480 = vmatprep.subr.mxu0 0.0
    %1481 = vmatpush1.msra.mxu0 0.0
    %1482 = vmatprep.subr.mxu0 0.0
    %1483 = vmatpush1.msra.mxu0 0.0
    %1484 = vmatprep.subr.mxu0 0.0
    %1485 = vmatpush1.msra.mxu0 0.0
    %1486 = vmatprep.subr.mxu0 0.0
    %1487 = vmatpush1.msra.mxu0 0.0
    %1488 = vmatprep.subr.mxu0 0.0
    %1489 = vmatpush1.msra.mxu0 0.0
    %1490 = vmatprep.subr.mxu0 0.0
    %1491 = vmatpush1.msra.mxu0 0.0
    %1492 = vmatprep.subr.mxu0 0.0
    %1493 = vmatpush1.msra.mxu0 0.0
    %1494 = vmatprep.subr.mxu0 0.0
    %1495 = vmatpush1.msra.mxu0 0.0
    %1496 = vmatprep.subr.mxu0 0.0
    %1497 = vmatpush1.msra.mxu0 0.0
    %1498 = vmatprep.subr.mxu0 0.0
    %1499 = vmatpush1.msra.mxu0 0.0
    %1500 = vmatprep.subr.mxu0 0.0
    %1501 = vmatpush1.msra.mxu0 0.0
    %1502 = vmatprep.subr.mxu0 0.0
    %1503 = vmatpush1.msra.mxu0 0.0
    %1504 = vmatprep.subr.mxu0 0.0
    %1505 = vmatpush1.msra.mxu0 0.0
    %1506 = vmatprep.subr.mxu0 0.0
    %1507 = vmatpush1.msra.mxu0 %v1457
    %1508 = vmatprep.subr.mxu0 0.0
    %1509 = vmatpush1.msra.mxu0 %v1456
    %1510 = vmatprep.subr.mxu0 0.0
    %1511 = vmatpush2.msra.mxu0 0.0
    %1512 = vmatprep.subr.mxu0 0.0
    %1513 = vmatpush2.msra.mxu0 0.0
    %1514 = vmatprep.subr.mxu0 0.0
    %1515 = vmatpush2.msra.mxu0 0.0
    %1516 = vmatprep.subr.mxu0 0.0
    %1517 = vmatpush2.msra.mxu0 0.0
    %1518 = vmatprep.subr.mxu0 0.0
    %1519 = vmatpush2.msra.mxu0 0.0
    %1520 = vmatprep.subr.mxu0 0.0
    %1521 = vmatpush2.msra.mxu0 0.0
    %1522 = vmatprep.subr.mxu0 0.0
    %1523 = vmatpush2.msra.mxu0 0.0
    %1524 = vmatprep.subr.mxu0 0.0
    %1525 = vmatpush2.msra.mxu0 0.0
    %1526 = vmatprep.subr.mxu0 0.0
    %1527 = vmatpush2.msra.mxu0 0.0
    %1528 = vmatprep.subr.mxu0 0.0
    %1529 = vmatpush2.msra.mxu0 0.0
    %1530 = vmatprep.subr.mxu0 0.0
    %1531 = vmatpush2.msra.mxu0 0.0
    %1532 = vmatprep.subr.mxu0 0.0
    %1533 = vmatpush2.msra.mxu0 0.0
    %1534 = vmatprep.subr.mxu0 0.0
    %1535 = vmatpush2.msra.mxu0 0.0
    %1536 = vmatprep.subr.mxu0 0.0
    %1537 = vmatpush2.msra.mxu0 0.0
    %1538 = vmatprep.subr.mxu0 0.0
    %1539 = vmatpush2.msra.mxu0 0.0
    %1540 = vmatprep.subr.mxu0 0.0
    %1541 = vmatpush2.msra.mxu0 0.0
    %1542 = vmatprep.mubr.f32.mxu0 0.0
    %1543 = vmatmul.mubr.f32.gmra.mxu0 %v1470
    %v1544 = vpop.f32.mrf.mxu0
    %v1545 = vadd.f32 0.0, %v1544
    %v1546 = vpop.f32.mrf.mxu0
    %1547 = vmatprep.mubr.f32.mxu0 0.0
    %1548 = vmatmul.mubr.f32.gmra.mxu0 %v1472
    %v1549 = vpop.f32.mrf.mxu0
    %v1550 = vadd.f32 0.0, %v1549
    %v1551 = vpop.f32.mrf.mxu0
    %1552 = vmatprep.mubr.f32.mxu0 0.0
    %1553 = vmatmul.mubr.f32.gmra.mxu0 %v1474
    %v1554 = vpop.f32.mrf.mxu0
    %v1555 = vadd.f32 0.0, %v1554
    %v1556 = vpop.f32.mrf.mxu0
    %1557 = vmatprep.mubr.f32.mxu0 0.0
    %1558 = vmatmul.mubr.f32.gmra.mxu0 %v1476
    %v1559 = vpop.f32.mrf.mxu0
    %v1560 = vadd.f32 0.0, %v1559
    %v1561 = vpop.f32.mrf.mxu0
    %1562 = vdwg.mxu0
    %v1563 = vsel %vm795, %v1545, 0.0
    %v1564 = vsel %vm795, %v1550, 0.0
    %v1565 = vadd.f32 %v1563, %v1564
    %v1566 = vsel %vm795, %v1555, 0.0
    %v1567 = vadd.f32 %v1565, %v1566
    %v1568 = vsel %vm795, %v1560, 0.0
    %v1569 = vadd.f32 %v1567, %v1568
    %v1570 = vrot.slane %v1569, 4
    %v1571 = vadd.f32 %v1569, %v1570
    %v1572 = vrot.slane %v1571, 2
    %v1573 = vadd.f32 %v1571, %v1572
    %v1574 = vrot.slane %v1573, 1
    %v1575 = vadd.f32 %v1573, %v1574
    %v1576 = vmul.f32 %v1545, %v1545
    %v1577 = vmul.f32 %v1550, %v1550
    %v1578 = vmul.f32 %v1555, %v1555
    %v1579 = vmul.f32 %v1560, %v1560
    %v1580 = vsel %vm795, %v1576, 0.0
    %v1581 = vsel %vm795, %v1577, 0.0
    %v1582 = vadd.f32 %v1580, %v1581
    %v1583 = vsel %vm795, %v1578, 0.0
    %v1584 = vadd.f32 %v1582, %v1583
    %v1585 = vsel %vm795, %v1579, 0.0
    %v1586 = vadd.f32 %v1584, %v1585
    %v1587 = vrot.slane %v1586, 4
    %v1588 = vadd.f32 %v1586, %v1587
    %v1589 = vrot.slane %v1588, 2
    %v1590 = vadd.f32 %v1588, %v1589
    %v1591 = vrot.slane %v1590, 1
    %v1592 = vadd.f32 %v1590, %v1591
    %v1593 = vmul.f32 %v1575, 0.03125
    %v1594 = vmul.f32 %v1592, 0.03125
    %v1595 = vmul.f32 %v1593, %v1593
    %v1596 = vsub.f32 %v1594, %v1595
    %v1597 = vmax.f32 %v1596, 0.0
    %v1598 = vld [vmem:[%s12] sm:$0x1]
    %v1599 = vadd.f32 %v1597, 1e-05
    %v1600 = vrsqrt.pop %v1599
    %v1601 = vmul.f32 %v1598, %v1600
    %v1602 = vld [vmem:[%s13] sm:$0x1]
    %v1603 = vmul.f32 %v1593, %v1601
    %v1604 = vsub.f32 %v1602, %v1603
    %v1606 = vlaneseq
    %v1607 = vshrl.u32 %v1606, 7
    %v1608 = vsub.s32 0, %v1607
    %v1609 = vrot.slane %v1601, %v1608
    %v1611 = vmul.f32 %v1545, %v1609
    %v1612 = vmul.f32 %v1550, %v1609
    %v1613 = vmul.f32 %v1555, %v1609
    %v1614 = vmul.f32 %v1560, %v1609
    %v1616 = vlaneseq
    %v1617 = vshrl.u32 %v1616, 7
    %v1618 = vsub.s32 0, %v1617
    %v1619 = vrot.slane %v1604, %v1618
    %v1621 = vadd.f32 %v1611, %v1619
    %v1622 = vadd.f32 %v1612, %v1619
    %v1623 = vadd.f32 %v1613, %v1619
    %v1624 = vadd.f32 %v1614, %v1619
    %v1625 = vsel %vm795, %v1423, 0.0
    %v1626 = vsel %vm795, %v1428, 0.0
    %v1627 = vadd.f32 %v1625, %v1626
    %v1628 = vrot.slane %v1627, 4
    %v1629 = vadd.f32 %v1627, %v1628
    %v1630 = vrot.slane %v1629, 2
    %v1631 = vadd.f32 %v1629, %v1630
    %v1632 = vrot.slane %v1631, 1
    %v1633 = vadd.f32 %v1631, %v1632
    %v1634 = vsel %vm795, %v1433, 0.0
    %v1635 = vsel %vm795, %v1438, 0.0
    %v1636 = vadd.f32 %v1634, %v1635
    %v1637 = vrot.slane %v1636, 4
    %v1638 = vadd.f32 %v1636, %v1637
    %v1639 = vrot.slane %v1638, 2
    %v1640 = vadd.f32 %v1638, %v1639
    %v1641 = vrot.slane %v1640, 1
    %v1642 = vadd.f32 %v1640, %v1641
    %v1643 = vrcp.pop 16.0
    %v1644 = vmul.f32 %v1633, %v1643
    %v1645 = vmul.f32 %v1642, %v1643
    %v1646 = vld [vmem:[%s7] sm:$0xff]
    %v1647 = vld [vmem:[%s7 + $0x8] sm:$0xff]
    %v1648 = vld [vmem:[%s7 + $0x10] sm:$0xff]
    %v1649 = vld [vmem:[%s7 + $0x18] sm:$0xff]
    %v1650 = vld [vmem:[%s8] sm:$0x1]
    %v1652 = vlaneseq
    %v1653 = vshrl.u32 %v1652, 7
    %v1654 = vsub.s32 0, %v1653
    %v1655 = vrot.slane %v1650, %v1654
    %vm1659 = vcmask 1041409
    %v1660 = vsel %vm1659, %v1645, %v1644
    %v1661 = vsel %vm795, %v1660, 0
    %1663 = vmatprep.subr.mxu0 0.0
    %1664 = vmatpush1.msra.mxu0 0.0
    %1665 = vmatprep.subr.mxu0 0.0
    %1666 = vmatpush1.msra.mxu0 0.0
    %1667 = vmatprep.subr.mxu0 0.0
    %1668 = vmatpush1.msra.mxu0 0.0
    %1669 = vmatprep.subr.mxu0 0.0
    %1670 = vmatpush1.msra.mxu0 0.0
    %1671 = vmatprep.subr.mxu0 0.0
    %1672 = vmatpush1.msra.mxu0 0.0
    %1673 = vmatprep.subr.mxu0 0.0
    %1674 = vmatpush1.msra.mxu0 0.0
    %1675 = vmatprep.subr.mxu0 0.0
    %1676 = vmatpush1.msra.mxu0 0.0
    %1677 = vmatprep.subr.mxu0 0.0
    %1678 = vmatpush1.msra.mxu0 0.0
    %1679 = vmatprep.subr.mxu0 0.0
    %1680 = vmatpush1.msra.mxu0 0.0
    %1681 = vmatprep.subr.mxu0 0.0
    %1682 = vmatpush1.msra.mxu0 0.0
    %1683 = vmatprep.subr.mxu0 0.0
    %1684 = vmatpush1.msra.mxu0 0.0
    %1685 = vmatprep.subr.mxu0 0.0
    %1686 = vmatpush1.msra.mxu0 0.0
    %1687 = vmatprep.subr.mxu0 0.0
    %1688 = vmatpush1.msra.mxu0 %v1649
    %1689 = vmatprep.subr.mxu0 0.0
    %1690 = vmatpush1.msra.mxu0 %v1648
    %1691 = vmatprep.subr.mxu0 0.0
    %1692 = vmatpush1.msra.mxu0 %v1647
    %1693 = vmatprep.subr.mxu0 0.0
    %1694 = vmatpush1.msra.mxu0 %v1646
    %1695 = vmatprep.subr.mxu0 0.0
    %1696 = vmatpush2.msra.mxu0 0.0
    %1697 = vmatprep.subr.mxu0 0.0
    %1698 = vmatpush2.msra.mxu0 0.0
    %1699 = vmatprep.subr.mxu0 0.0
    %1700 = vmatpush2.msra.mxu0 0.0
    %1701 = vmatprep.subr.mxu0 0.0
    %1702 = vmatpush2.msra.mxu0 0.0
    %1703 = vmatprep.subr.mxu0 0.0
    %1704 = vmatpush2.msra.mxu0 0.0
    %1705 = vmatprep.subr.mxu0 0.0
    %1706 = vmatpush2.msra.mxu0 0.0
    %1707 = vmatprep.subr.mxu0 0.0
    %1708 = vmatpush2.msra.mxu0 0.0
    %1709 = vmatprep.subr.mxu0 0.0
    %1710 = vmatpush2.msra.mxu0 0.0
    %1711 = vmatprep.subr.mxu0 0.0
    %1712 = vmatpush2.msra.mxu0 0.0
    %1713 = vmatprep.subr.mxu0 0.0
    %1714 = vmatpush2.msra.mxu0 0.0
    %1715 = vmatprep.subr.mxu0 0.0
    %1716 = vmatpush2.msra.mxu0 0.0
    %1717 = vmatprep.subr.mxu0 0.0
    %1718 = vmatpush2.msra.mxu0 0.0
    %1719 = vmatprep.subr.mxu0 0.0
    %1720 = vmatpush2.msra.mxu0 0.0
    %1721 = vmatprep.subr.mxu0 0.0
    %1722 = vmatpush2.msra.mxu0 0.0
    %1723 = vmatprep.subr.mxu0 0.0
    %1724 = vmatpush2.msra.mxu0 0.0
    %1725 = vmatprep.subr.mxu0 0.0
    %1726 = vmatpush2.msra.mxu0 0.0
    %1727 = vmatprep.mubr.f32.mxu0 0.0
    %1728 = vmatmul.mubr.f32.gmra.mxu0 %v1661
    %v1729 = vpop.f32.mrf.mxu0
    %v1730 = vadd.f32 %v1655, %v1729
    %v1731 = vpop.f32.mrf.mxu0
    %1732 = vdwg.mxu0
    %v1733 = vmax.f32 %v1730, 0.0
    %v1734 = vld [vmem:[%s9] sm:$0x3]
    %v1735 = vld [vmem:[%s10] sm:$0x1]
    %v1737 = vlaneseq
    %v1738 = vshrl.u32 %v1737, 7
    %v1739 = vsub.s32 0, %v1738
    %v1740 = vrot.slane %v1735, %v1739
    %vm1742 = vcmask 15360
    %v1744 = vsel %vm1742, %v1733, 0
    %vm1746 = vcmask 1041408
    %v1748 = vsel %vm1746, %v1734, 0
    %1750 = vmatprep.subr.mxu0 0.0
    %1751 = vmatpush1.msra.mxu0 0.0
    %1752 = vmatprep.subr.mxu0 0.0
    %1753 = vmatpush1.msra.mxu0 0.0
    %1754 = vmatprep.subr.mxu0 0.0
    %1755 = vmatpush1.msra.mxu0 0.0
    %1756 = vmatprep.subr.mxu0 0.0
    %1757 = vmatpush1.msra.mxu0 0.0
    %1758 = vmatprep.subr.mxu0 0.0
    %1759 = vmatpush1.msra.mxu0 0.0
    %1760 = vmatprep.subr.mxu0 0.0
    %1761 = vmatpush1.msra.mxu0 0.0
    %1762 = vmatprep.subr.mxu0 0.0
    %1763 = vmatpush1.msra.mxu0 0.0
    %1764 = vmatprep.subr.mxu0 0.0
    %1765 = vmatpush1.msra.mxu0 0.0
    %1766 = vmatprep.subr.mxu0 0.0
    %1767 = vmatpush1.msra.mxu0 0.0
    %1768 = vmatprep.subr.mxu0 0.0
    %1769 = vmatpush1.msra.mxu0 0.0
    %1770 = vmatprep.subr.mxu0 0.0
    %1771 = vmatpush1.msra.mxu0 0.0
    %1772 = vmatprep.subr.mxu0 0.0
    %1773 = vmatpush1.msra.mxu0 0.0
    %1774 = vmatprep.subr.mxu0 0.0
    %1775 = vmatpush1.msra.mxu0 0.0
    %1776 = vmatprep.subr.mxu0 0.0
    %1777 = vmatpush1.msra.mxu0 0.0
    %1778 = vmatprep.subr.mxu0 0.0
    %1779 = vmatpush1.msra.mxu0 0.0
    %1780 = vmatprep.subr.mxu0 0.0
    %1781 = vmatpush1.msra.mxu0 %v1748
    %1782 = vmatprep.subr.mxu0 0.0
    %1783 = vmatpush2.msra.mxu0 0.0
    %1784 = vmatprep.subr.mxu0 0.0
    %1785 = vmatpush2.msra.mxu0 0.0
    %1786 = vmatprep.subr.mxu0 0.0
    %1787 = vmatpush2.msra.mxu0 0.0
    %1788 = vmatprep.subr.mxu0 0.0
    %1789 = vmatpush2.msra.mxu0 0.0
    %1790 = vmatprep.subr.mxu0 0.0
    %1791 = vmatpush2.msra.mxu0 0.0
    %1792 = vmatprep.subr.mxu0 0.0
    %1793 = vmatpush2.msra.mxu0 0.0
    %1794 = vmatprep.subr.mxu0 0.0
    %1795 = vmatpush2.msra.mxu0 0.0
    %1796 = vmatprep.subr.mxu0 0.0
    %1797 = vmatpush2.msra.mxu0 0.0
    %1798 = vmatprep.subr.mxu0 0.0
    %1799 = vmatpush2.msra.mxu0 0.0
    %1800 = vmatprep.subr.mxu0 0.0
    %1801 = vmatpush2.msra.mxu0 0.0
    %1802 = vmatprep.subr.mxu0 0.0
    %1803 = vmatpush2.msra.mxu0 0.0
    %1804 = vmatprep.subr.mxu0 0.0
    %1805 = vmatpush2.msra.mxu0 0.0
    %1806 = vmatprep.subr.mxu0 0.0
    %1807 = vmatpush2.msra.mxu0 0.0
    %1808 = vmatprep.subr.mxu0 0.0
    %1809 = vmatpush2.msra.mxu0 0.0
    %1810 = vmatprep.subr.mxu0 0.0
    %1811 = vmatpush2.msra.mxu0 0.0
    %1812 = vmatprep.subr.mxu0 0.0
    %1813 = vmatpush2.msra.mxu0 0.0
    %1814 = vmatprep.mubr.f32.mxu0 0.0
    %1815 = vmatmul.mubr.f32.gmra.mxu0 %v1744
    %v1816 = vpop.f32.mrf.mxu0
    %v1817 = vadd.f32 %v1740, %v1816
    %v1818 = vpop.f32.mrf.mxu0
    %1819 = vdwg.mxu0
    %v1820 = vsub.f32 0.0, %v1817
    %v1821 = vmul.f32 %v1820, 1.442695
    %v1822 = vpow.pop %v1821
    %v1823 = vadd.f32 %v1822, 1.0
    %v1824 = vrcp.pop %v1823
    %v1829 = vcombine.high %v1423, %v1423
    %v1830 = vcombine.high %v1428, %v1428
    %v1831 = vcombine.high %v1433, %v1433
    %v1832 = vcombine.high %v1438, %v1438
    %v1839 = vunpack.c.l.s4 1966171168
    %v1840 = vunpack.c.0.s8 %v1839
    %v1841 = vlaneseq
    %v1842 = vshrl.u32 %v1841, 7
    %v1843 = vsub.s32 %v1840, %v1842
    %v1844 = vrot.slane %v1824, %v1843
    %v1845 = vcombine.high %v1844, %v1844
    %v1847 = vunpack.c.l.s4 1966171168
    %v1848 = vunpack.c.0.s8 %v1847
    %v1849 = vlaneseq
    %v1850 = vshrl.u32 %v1849, 7
    %v1851 = vsub.s32 %v1848, %v1850
    %v1852 = vrot.slane %v1844, %v1851
    %v1854 = vunpack.c.l.s4 1966171168
    %v1855 = vunpack.c.0.s8 %v1854
    %v1856 = vlaneseq
    %v1857 = vshrl.u32 %v1856, 7
    %v1858 = vsub.s32 %v1855, %v1857
    %v1859 = vrot.slane %v1845, %v1858
    %v1860 = vlaneseq
    %v1861 = vshrl.u32 %v1860, 7
    %v1862 = vsub.s32 0, %v1861
    %v1863 = vrot.slane %v1852, %v1862
    %v1864 = vlaneseq
    %v1865 = vshrl.u32 %v1864, 7
    %v1866 = vsub.s32 0, %v1865
    %v1867 = vrot.slane %v1859, %v1866
    %v1870 = vmul.f32 %v1423, %v1863
    %v1871 = vmul.f32 %v1829, %v1863
    %v1872 = vmul.f32 %v1428, %v1863
    %v1873 = vmul.f32 %v1830, %v1863
    %v1874 = vmul.f32 %v1433, %v1867
    %v1875 = vmul.f32 %v1831, %v1867
    %v1876 = vmul.f32 %v1438, %v1867
    %v1877 = vmul.f32 %v1832, %v1867
    %v1882 = vcombine.high %v1621, %v1621
    %v1883 = vcombine.high %v1622, %v1622
    %v1884 = vcombine.high %v1623, %v1623
    %v1885 = vcombine.high %v1624, %v1624
    %v1890 = vadd.f32 %v1870, %v1621
    %v1891 = vadd.f32 %v1871, %v1882
    %v1892 = vadd.f32 %v1872, %v1622
    %v1893 = vadd.f32 %v1873, %v1883
    %v1894 = vadd.f32 %v1874, %v1623
    %v1895 = vadd.f32 %v1875, %v1884
    %v1896 = vadd.f32 %v1876, %v1624
    %v1897 = vadd.f32 %v1877, %v1885
    %v1898 = vcombine.low %v1890, %v1892
    %v1900 = vunpack.c.l.s4 1983009808
    %v1901 = vunpack.c.0.s8 %v1900
    %v1902 = vlaneseq
    %v1903 = vshrl.u32 %v1902, 7
    %v1904 = vsub.s32 %v1901, %v1903
    %v1905 = vrot.slane %v1898, %v1904
    %v1906 = vcombine.low %v1891, %v1893
    %v1908 = vunpack.c.l.s4 1983009808
    %v1909 = vunpack.c.0.s8 %v1908
    %v1910 = vlaneseq
    %v1911 = vshrl.u32 %v1910, 7
    %v1912 = vsub.s32 %v1909, %v1911
    %v1913 = vrot.slane %v1906, %v1912
    %v1914 = vcombine.low %v1905, %v1913
    %v1915 = vcombine.high %v1905, %v1913
    %v1917 = vunpack.c.l.s4 1934713408
    %v1918 = vunpack.c.0.s8 %v1917
    %v1919 = vlaneseq
    %v1920 = vshrl.u32 %v1919, 7
    %v1921 = vsub.s32 %v1918, %v1920
    %v1922 = vrot.slane %v1914, %v1921
    %v1924 = vunpack.c.l.s4 1934713408
    %v1925 = vunpack.c.0.s8 %v1924
    %v1926 = vlaneseq
    %v1927 = vshrl.u32 %v1926, 7
    %v1928 = vsub.s32 %v1925, %v1927
    %v1929 = vrot.slane %v1915, %v1928
    %v1930 = vcombine.high %v1922, 0.0
    %v1931 = vcombine.high %v1929, 0.0
    %v1932 = vcombine.low %v1894, %v1896
    %v1934 = vunpack.c.l.s4 1983009808
    %v1935 = vunpack.c.0.s8 %v1934
    %v1936 = vlaneseq
    %v1937 = vshrl.u32 %v1936, 7
    %v1938 = vsub.s32 %v1935, %v1937
    %v1939 = vrot.slane %v1932, %v1938
    %v1940 = vcombine.low %v1895, %v1897
    %v1942 = vunpack.c.l.s4 1983009808
    %v1943 = vunpack.c.0.s8 %v1942
    %v1944 = vlaneseq
    %v1945 = vshrl.u32 %v1944, 7
    %v1946 = vsub.s32 %v1943, %v1945
    %v1947 = vrot.slane %v1940, %v1946
    %v1948 = vcombine.low %v1939, %v1947
    %v1949 = vcombine.high %v1939, %v1947
    %v1951 = vunpack.c.l.s4 1934713408
    %v1952 = vunpack.c.0.s8 %v1951
    %v1953 = vlaneseq
    %v1954 = vshrl.u32 %v1953, 7
    %v1955 = vsub.s32 %v1952, %v1954
    %v1956 = vrot.slane %v1948, %v1955
    %v1958 = vunpack.c.l.s4 1934713408
    %v1959 = vunpack.c.0.s8 %v1958
    %v1960 = vlaneseq
    %v1961 = vshrl.u32 %v1960, 7
    %v1962 = vsub.s32 %v1959, %v1961
    %v1963 = vrot.slane %v1949, %v1962
    %v1964 = vcombine.high %v1956, 0.0
    %v1965 = vcombine.high %v1963, 0.0
    %v1968 = vcombine.low %v1922, %v1956
    %v1972 = vcombine.low %v1930, %v1964
    %1973 = vrot.lane.b32.xlu0 %v1972, 32
    %v1974 = vpop.permute.xlu0 %1973
    %v1978 = vcombine.low %v1929, %v1963
    %1979 = vrot.lane.b32.xlu0 %v1978, 64
    %v1980 = vpop.permute.xlu0 %1979
    %v1984 = vcombine.low %v1931, %v1965
    %1985 = vrot.lane.b32.xlu0 %v1984, 96
    %v1986 = vpop.permute.xlu0 %1985
    %v1988 = vsel %vm795, %v1968, %v1974
    %vm1989 = vcmask 523264
    %v1990 = vsel %vm1989, %v1988, %v1980
    %vm1991 = vcmask 785408
    %v1992 = vsel %vm1991, %v1990, %v1986
    %1993 = vst [vmem:[#allocation6] sm:$0xff] %v1992
    // Predicated region
    $region58: #{tpu_custom_call.1} parent=1 // pred_check
      _
    $region59: #{tpu_custom_call.1} parent=1 // pred_check_branch
      %1995 = sbr.rel (0) target = $region61
    $region60: #{tpu_custom_call.1} parent=1 // pred_region
      %s1997 = ssub.s32 128, 128
      %1998 = vsyncadd [#allocation7], %s1997
      %s2000 = sshll.u32 [#allocation6], 4
      %s2001 = int_to_ptr.vmem [resolvable:$true] %s2000
      %2003 = dma.vmem_to_hbm [thread:$0]  %s2001, 128, %s14, [#allocation7]
    $region61: #{tpu_custom_call.1} parent=1 // pred_fallthru
      _
    // Predicated region
    $region62: #{tpu_custom_call.1} parent=1 // pred_check
      _
    $region63: #{tpu_custom_call.1} parent=1 // pred_check_branch
      %2005 = sbr.rel (0) target = $region65
    $region64: #{tpu_custom_call.1} parent=1 // pred_region
      %2006 = dma.done [#allocation7], 128
    $region65: #{tpu_custom_call.1} parent=1 // pred_fallthru
      _
    %2007 = vsyncpa [#allocation7], 1

</llo_original>
